<compile_context>
chip_gen: v7x
topology: tpu7x:2x2x1
jax: 0.10.0
libtpu: 0.0.40
codegen_flags: <defaults>
</compile_context>

<pallas_src>
import functools
import math

import numpy as np
import jax
import jax.numpy as jnp
from jax import lax
from jax.experimental import pallas as pl
from jax.experimental.pallas import tpu as pltpu


def _round_up(a, b):
    return -(-a // b) * b


# ---------------------------------------------------------------------------
# Packed-operand layouts (shared by the packer and the kernel).
# ---------------------------------------------------------------------------
# constant slab: one constant vector per 128-lane row
(C_BO, C_GH, C_STATE, C_D2W, C_D2B, C_R1B, C_R1WD, C_R2B,
 C_LNG, C_LNB, C_A1B, C_A2B, C_A3B, C_LEV) = range(14)
C_ROWS = _round_up(14, 8)          # 16
C_WIDTH = 128
SEG = 128                          # lane stripe width for fused-wx segments / outputs


def _w2_layout(H, M):
    """Row offsets of each weight inside the packed (rows, 128) weight slab."""
    H2 = H // 2
    off = {}
    r = 0
    off["wo"] = r; r += H          # attention_output.T       (H,  M)
    off["r1"] = r; r += M          # regulation l1 (state)    (M,  H)
    off["r2"] = r; r += H          # regulation l2.T          (H,  M)
    off["a1"] = r; r += M          # awareness l1 (reg part)  (M,  H)
    off["a2"] = r; r += H          # awareness l2.T           (H,  H2)
    off["a3"] = r; r += H2         # awareness l3.T           (H2, 4)
    return off, _round_up(r, 8)


# ---------------------------------------------------------------------------
# The Pallas kernel: one module instance's full forward pass per grid step.
# ---------------------------------------------------------------------------
def mindfulness_kernel(x_ref, wx_ref, w2_ref, c_ref, out_ref, *, H, M, B):
    f32 = jnp.float32
    H2 = H // 2
    M3 = 3 * M
    inv_sqrt_h = 1.0 / math.sqrt(H)
    w2off, _ = _w2_layout(H, M)

    x = x_ref[...]                               # (B, D_in + 1)  (ones column appended)
    c = c_ref[...]                               # (C_ROWS, 128) constant slab

    def crow(r, n):                              # (1, n) constant row
        return c[r:r + 1, :n]

    def sigmoid(v):                              # exact, single EUP tanh
        return 0.5 * jnp.tanh(0.5 * v) + 0.5

    def w2blk(name, rows, cols):                 # static slice of weight slab
        r0 = w2off[name]
        return w2_ref[r0:r0 + rows, :cols]

    # ---- ONE fused MXU pass for every matmul whose LHS is x (biases folded) --
    xf = jnp.dot(x, wx_ref[...], preferred_element_type=f32)     # (B, 6*128)
    q = xf[:, 0 * SEG:0 * SEG + H]                               # already + bq
    k = xf[:, 1 * SEG:1 * SEG + H]                               # already + bk
    v = xf[:, 2 * SEG:2 * SEG + H]                               # already + bv
    gi = xf[:, 3 * SEG:3 * SEG + M3]                             # already + b_ih
    dh = jnp.maximum(xf[:, 4 * SEG:4 * SEG + H2], 0.0)           # already + d1b
    a1x = xf[:, 5 * SEG:5 * SEG + H]                             # awareness x-part

    # ---- self-attention over the batch dimension -----------------------------
    scores = lax.dot_general(q, k, (((1,), (1,)), ((), ())),     # q @ k.T
                             preferred_element_type=f32) * inv_sqrt_h
    scores = scores - jnp.max(scores, axis=-1, keepdims=True)
    e = jnp.exp(scores)
    attn_w = e / jnp.sum(e, axis=-1, keepdims=True)              # exact softmax
    attended = jnp.dot(attn_w, v, preferred_element_type=f32)    # (B, H)
    mindful = jnp.dot(attended, w2blk("wo", H, M),
                      preferred_element_type=f32) + crow(C_BO, M)

    # ---- distraction detector (2nd Linear has N==1 -> mul + lane reduce) -----
    distr = sigmoid(jnp.sum(dh * crow(C_D2W, H2), axis=-1, keepdims=True)
                    + crow(C_D2B, 1))                            # (B, 1)

    # ---- GRUCell; hidden path (state @ W_hh.T + b_hh) hoisted to C_GH --------
    gh = crow(C_GH, M3)                                          # (1, 3M) constant
    r_g = sigmoid(gi[:, :M] + gh[:, :M])
    z_g = sigmoid(gi[:, M:2 * M] + gh[:, M:2 * M])
    n_g = jnp.tanh(gi[:, 2 * M:] + r_g * gh[:, 2 * M:])
    h_new = (1.0 - z_g) * n_g + z_g * crow(C_STATE, M)           # (B, M)

    # ---- regulation network: concat([h, distr]) split into matmul + rank-1 ---
    reg_h = jnp.dot(h_new, w2blk("r1", M, H), preferred_element_type=f32) \
        + distr * crow(C_R1WD, H) + crow(C_R1B, H)
    reg_h = jnp.maximum(reg_h, 0.0)
    reg_adj = jnp.tanh(jnp.dot(reg_h, w2blk("r2", H, M),
                               preferred_element_type=f32) + crow(C_R2B, M))
    regulated = h_new + reg_adj

    # ---- LayerNorm (eps = 1e-5, PyTorch default) -----------------------------
    mu = jnp.mean(regulated, axis=-1, keepdims=True)
    d0 = regulated - mu
    var = jnp.mean(d0 * d0, axis=-1, keepdims=True)
    regulated = d0 * lax.rsqrt(var + 1e-5)
    regulated = regulated * crow(C_LNG, M) + crow(C_LNB, M)

    # ---- awareness classifier (Dropout == identity, eval mode) ---------------
    a1 = jnp.maximum(jnp.dot(regulated, w2blk("a1", M, H),
                             preferred_element_type=f32) + a1x + crow(C_A1B, H), 0.0)
    a2 = jnp.maximum(jnp.dot(a1, w2blk("a2", H, H2),
                             preferred_element_type=f32) + crow(C_A2B, H2), 0.0)
    logits = jnp.dot(a2, w2blk("a3", H2, 4),
                     preferred_element_type=f32) + crow(C_A3B, 4)     # (B, 4)
    logits = logits - jnp.max(logits, axis=-1, keepdims=True)
    pe = jnp.exp(logits)
    probs = pe / jnp.sum(pe, axis=-1, keepdims=True)                  # exact softmax
    score = jnp.sum(probs * crow(C_LEV, 4), axis=-1, keepdims=True)   # (B, 1)

    out_feat = mindful + regulated                                    # (B, M)

    # ---- five lane-aligned stripes, stored directly (no concat / rotates) ----
    out_ref[:, 0 * SEG:0 * SEG + M] = out_feat
    out_ref[:, 1 * SEG:1 * SEG + B] = attn_w
    out_ref[:, 2 * SEG:2 * SEG + 4] = probs
    out_ref[:, 3 * SEG:3 * SEG + 1] = distr
    out_ref[:, 4 * SEG:4 * SEG + 1] = score


# ---------------------------------------------------------------------------
# Parameter construction (deterministic, PyTorch-style uniform init).
# ---------------------------------------------------------------------------
def _linear_init(key, fan_in, fan_out):
    k1, k2 = jax.random.split(key)
    bound = 1.0 / math.sqrt(fan_in)
    w = jax.random.uniform(k1, (fan_out, fan_in), jnp.float32, -bound, bound)
    b = jax.random.uniform(k2, (fan_out,), jnp.float32, -bound, bound)
    return w, b


def init_params(key, input_dim, mindfulness_dim, hidden_dim=64):
    ks = jax.random.split(key, 16)
    p = {}
    p["wq"], p["bq"] = _linear_init(ks[0], input_dim, hidden_dim)
    p["wk"], p["bk"] = _linear_init(ks[1], input_dim, hidden_dim)
    p["wv"], p["bv"] = _linear_init(ks[2], input_dim, hidden_dim)
    p["wo"], p["bo"] = _linear_init(ks[3], hidden_dim, mindfulness_dim)
    p["state"] = jnp.zeros((mindfulness_dim,), jnp.float32)
    gb = 1.0 / math.sqrt(mindfulness_dim)
    g = jax.random.split(ks[4], 4)
    p["gru_wih"] = jax.random.uniform(g[0], (3 * mindfulness_dim, input_dim), jnp.float32, -gb, gb)
    p["gru_whh"] = jax.random.uniform(g[1], (3 * mindfulness_dim, mindfulness_dim), jnp.float32, -gb, gb)
    p["gru_bih"] = jax.random.uniform(g[2], (3 * mindfulness_dim,), jnp.float32, -gb, gb)
    p["gru_bhh"] = jax.random.uniform(g[3], (3 * mindfulness_dim,), jnp.float32, -gb, gb)
    p["a1w"], p["a1b"] = _linear_init(ks[5], mindfulness_dim + input_dim, hidden_dim)
    p["a2w"], p["a2b"] = _linear_init(ks[6], hidden_dim, hidden_dim // 2)
    p["a3w"], p["a3b"] = _linear_init(ks[7], hidden_dim // 2, 4)
    p["d1w"], p["d1b"] = _linear_init(ks[8], input_dim, hidden_dim // 2)
    p["d2w"], p["d2b"] = _linear_init(ks[9], hidden_dim // 2, 1)
    p["r1w"], p["r1b"] = _linear_init(ks[10], mindfulness_dim + 1, hidden_dim)
    p["r2w"], p["r2b"] = _linear_init(ks[11], hidden_dim, mindfulness_dim)
    p["ln_g"] = jnp.ones((mindfulness_dim,), jnp.float32)
    p["ln_b"] = jnp.zeros((mindfulness_dim,), jnp.float32)
    return p


# ---------------------------------------------------------------------------
# One-time packing: fuse / transpose / pad all parameters into 3 operands.
# ---------------------------------------------------------------------------
def pack_params(params, input_dim, mindfulness_dim, hidden_dim):
    D, M, H = input_dim, mindfulness_dim, hidden_dim
    H2 = H // 2
    assert H % 8 == 0 and M % 8 == 0 and H <= C_WIDTH and 3 * M <= C_WIDTH

    g = lambda k: np.asarray(params[k], np.float32)

    a1w = g("a1w")                                  # (H, M + D)

    # fused x-path weight: 6 independent 128-lane segments, bias folded into
    # an extra row (matmul LHS gets a constant 1.0 column appended).
    wx = np.zeros((D + 1, 6 * SEG), np.float32)
    segments = [
        (g("wq").T,      g("bq")),                          # q
        (g("wk").T,      g("bk")),                          # k
        (g("wv").T,      g("bv")),                          # v
        (g("gru_wih").T, g("gru_bih")),                     # GRU input path
        (g("d1w").T,     g("d1b")),                         # distraction l1
        (a1w[:, M:].T,   np.zeros((H,), np.float32)),       # awareness x-part (no bias)
    ]
    for s, (w, b) in enumerate(segments):
        wx[:D, s * SEG:s * SEG + w.shape[1]] = w
        wx[D, s * SEG:s * SEG + b.shape[0]] = b

    # second weight slab: all matmuls whose LHS is an intermediate activation
    off, rows = _w2_layout(H, M)
    w2 = np.zeros((rows, C_WIDTH), np.float32)

    def put(name, w):
        w = np.asarray(w, np.float32)
        r0 = off[name]
        w2[r0:r0 + w.shape[0], :w.shape[1]] = w

    put("wo", g("wo").T)
    put("r1", g("r1w").T[:M, :])        # state part of regulation layer-1
    put("r2", g("r2w").T)
    put("a1", a1w.T[:M, :])             # regulated part of awareness layer-1
    put("a2", g("a2w").T)
    put("a3", g("a3w").T)

    # constants slab: one vector per 128-lane row
    c = np.zeros((C_ROWS, C_WIDTH), np.float32)

    def putc(r, v):
        v = np.asarray(v, np.float32).reshape(-1)
        c[r, :v.shape[0]] = v

    state = g("state")
    gh_const = state @ g("gru_whh").T + g("gru_bhh")     # constant GRU hidden path

    putc(C_BO, params["bo"])
    putc(C_GH, gh_const); putc(C_STATE, state)
    putc(C_D2W, params["d2w"]); putc(C_D2B, params["d2b"])
    putc(C_R1B, params["r1b"]); putc(C_R1WD, g("r1w")[:, M]); putc(C_R2B, params["r2b"])
    putc(C_LNG, params["ln_g"]); putc(C_LNB, params["ln_b"])
    putc(C_A1B, params["a1b"]); putc(C_A2B, params["a2b"]); putc(C_A3B, params["a3b"])
    putc(C_LEV, [0.2, 0.5, 0.8, 1.0])

    return jnp.asarray(wx), jnp.asarray(w2), jnp.asarray(c)


# ---------------------------------------------------------------------------
# Jitted forward: grid over module instances, one lane-dense output slab each.
# Accepts observations of shape (D,), (B, D) or (N, B, D)  (N = instances).
# ---------------------------------------------------------------------------
@functools.partial(jax.jit, static_argnames=("mindfulness_dim", "hidden_dim"))
def mindfulness_forward(observations, wx, w2, consts, *, mindfulness_dim, hidden_dim):
    x = observations
    if x.ndim == 1:
        x = x[None, :]
    single_instance = False
    if x.ndim == 2:
        x = x[None, ...]
        single_instance = True
    x = x.astype(jnp.float32)
    N, B, D = x.shape
    M, H = mindfulness_dim, hidden_dim

    # append a constant 1.0 column so the x-path biases ride the fused matmul
    x_aug = jnp.concatenate([x, jnp.ones((N, B, 1), jnp.float32)], axis=-1)
    Dp = D + 1
    OW = 5 * SEG

    kernel = functools.partial(mindfulness_kernel, H=H, M=M, B=B)
    slab = pl.pallas_call(
        kernel,
        out_shape=jax.ShapeDtypeStruct((N, B, OW), jnp.float32),
        grid=(N,),
        in_specs=[
            pl.BlockSpec((None, B, Dp), lambda n: (n, 0, 0)),
            pl.BlockSpec(wx.shape, lambda n: (0, 0)),        # resident across grid
            pl.BlockSpec(w2.shape, lambda n: (0, 0)),
            pl.BlockSpec(consts.shape, lambda n: (0, 0)),
        ],
        out_specs=pl.BlockSpec((None, B, OW), lambda n: (n, 0, 0)),
        compiler_params=pltpu.CompilerParams(
            dimension_semantics=("parallel",)),               # 2 TCs on v7x
    )(x_aug, wx, w2, consts)

    out_features = slab[..., 0 * SEG:0 * SEG + M]
    attn_w = slab[..., 1 * SEG:1 * SEG + B]
    probs = slab[..., 2 * SEG:2 * SEG + 4]
    distr = slab[..., 3 * SEG:3 * SEG + 1]
    score = slab[..., 4 * SEG:4 * SEG + 1]
    if single_instance:
        out_features, attn_w, probs, distr, score = (
            out_features[0], attn_w[0], probs[0], distr[0], score[0])
    return out_features, attn_w, probs, distr, score


def build_info(attn_w, probs, distr, score):
    """Host-side info dict (device->host sync); call outside the hot path."""
    attn_w = np.asarray(attn_w)
    probs = np.asarray(probs)
    return {
        "mindfulness_level": float(np.mean(np.asarray(score))),
        "distraction_level": float(np.mean(np.asarray(distr))),
        "awareness_distribution": probs.tolist(),
        "attention_weights": attn_w.tolist(),
        "present_moment_focus": float(np.mean(np.max(attn_w, axis=-1))),
    }


# ---------------------------------------------------------------------------
# Pure-JAX reference (identical math, unpacked params) for a sanity check.
# ---------------------------------------------------------------------------
def reference_forward(x, p):
    H = p["wq"].shape[0]
    M = p["state"].shape[0]
    B = x.shape[0]
    lin = lambda v, w, b: v @ w.T + b
    q, k, v = lin(x, p["wq"], p["bq"]), lin(x, p["wk"], p["bk"]), lin(x, p["wv"], p["bv"])
    attn_w = jax.nn.softmax(q @ k.T / math.sqrt(H), axis=-1)
    mindful = lin(attn_w @ v, p["wo"], p["bo"])
    distr = jax.nn.sigmoid(lin(jax.nn.relu(lin(x, p["d1w"], p["d1b"])), p["d2w"], p["d2b"]))
    h = jnp.broadcast_to(p["state"][None, :], (B, M))
    gi = x @ p["gru_wih"].T + p["gru_bih"]
    gh = h @ p["gru_whh"].T + p["gru_bhh"]
    r = jax.nn.sigmoid(gi[:, :M] + gh[:, :M])
    z = jax.nn.sigmoid(gi[:, M:2 * M] + gh[:, M:2 * M])
    n = jnp.tanh(gi[:, 2 * M:] + r * gh[:, 2 * M:])
    h_new = (1 - z) * n + z * h
    reg_in = jnp.concatenate([h_new, distr], axis=-1)
    reg = jnp.tanh(lin(jax.nn.relu(lin(reg_in, p["r1w"], p["r1b"])), p["r2w"], p["r2b"]))
    regulated = h_new + reg
    mu = regulated.mean(-1, keepdims=True)
    var = ((regulated - mu) ** 2).mean(-1, keepdims=True)
    regulated = (regulated - mu) / jnp.sqrt(var + 1e-5) * p["ln_g"] + p["ln_b"]
    aw_in = jnp.concatenate([regulated, x], axis=-1)
    a1 = jax.nn.relu(lin(aw_in, p["a1w"], p["a1b"]))
    a2 = jax.nn.relu(lin(a1, p["a2w"], p["a2b"]))
    probs = jax.nn.softmax(lin(a2, p["a3w"], p["a3b"]), axis=-1)
    levels = jnp.array([0.2, 0.5, 0.8, 1.0], jnp.float32)
    score = jnp.sum(probs * levels, axis=-1, keepdims=True)
    return mindful + regulated, attn_w, probs, distr, score


if __name__ == "__main__":
    key = jax.random.PRNGKey(0)
    k_param, k_obs, k_multi = jax.random.split(key, 3)

    B, input_dim, mindfulness_dim, hidden_dim = 4, 16, 32, 64
    params = init_params(k_param, input_dim, mindfulness_dim, hidden_dim)
    packed = pack_params(params, input_dim, mindfulness_dim, hidden_dim)
    observations = jax.random.normal(k_obs, (B, input_dim), jnp.float32)

    out, attn_w, probs, distr, score = mindfulness_forward(
        observations, *packed,
        mindfulness_dim=mindfulness_dim, hidden_dim=hidden_dim)
    out = jax.block_until_ready(out)

    ref_out, ref_attn, ref_probs, ref_distr, ref_score = reference_forward(observations, params)
    tol = dict(rtol=2e-3, atol=2e-3)
    np.testing.assert_allclose(np.asarray(out), np.asarray(ref_out), **tol)
    np.testing.assert_allclose(np.asarray(attn_w), np.asarray(ref_attn), **tol)
    np.testing.assert_allclose(np.asarray(probs), np.asarray(ref_probs), **tol)
    np.testing.assert_allclose(np.asarray(distr), np.asarray(ref_distr), **tol)
    np.testing.assert_allclose(np.asarray(score), np.asarray(ref_score), **tol)

    # multi-instance path: grid=(N,) amortizes dispatch; attention stays per-instance
    obs_multi = jax.random.normal(k_multi, (2, B, input_dim), jnp.float32)
    m_out, m_attn, m_probs, m_distr, m_score = mindfulness_forward(
        obs_multi, *packed,
        mindfulness_dim=mindfulness_dim, hidden_dim=hidden_dim)
    m_out = jax.block_until_ready(m_out)
    for n in range(2):
        r_out, r_attn, r_probs, r_distr, r_score = reference_forward(obs_multi[n], params)
        np.testing.assert_allclose(np.asarray(m_out[n]), np.asarray(r_out), **tol)
        np.testing.assert_allclose(np.asarray(m_attn[n]), np.asarray(r_attn), **tol)
        np.testing.assert_allclose(np.asarray(m_probs[n]), np.asarray(r_probs), **tol)

    _ = build_info(attn_w, probs, distr, score)   # lazy host-side info (off hot path)
    print("KERNEL_OK")
</pallas_src>

<mosaic_0001>
module attributes {stable_mosaic.version = 11 : i64} {
  func.func @mindfulness_kernel(%arg0: i32, %arg1: memref<1x4x17xf32, #tpu.memory_space<vmem>>, %arg2: memref<17x768xf32, #tpu.memory_space<vmem>>, %arg3: memref<288x128xf32, #tpu.memory_space<vmem>>, %arg4: memref<16x128xf32, #tpu.memory_space<vmem>>, %arg5: memref<1x4x640xf32, #tpu.memory_space<vmem>>) attributes {dimension_semantics = [#tpu.dimension_semantics<parallel>], iteration_bounds = array<i64: 1>, scalar_prefetch = 0 : i64, scratch_operands = 0 : i64, tpu.core_type = #tpu.core_type<tc>, window_params = [{transform_indices = @transform_0, window_bounds = array<i64: 1, 4, 17>}, {pipeline_mode = #tpu.pipeline_mode<synchronous>, transform_indices = @transform_1, window_bounds = array<i64: 17, 768>}, {pipeline_mode = #tpu.pipeline_mode<synchronous>, transform_indices = @transform_2, window_bounds = array<i64: 288, 128>}, {pipeline_mode = #tpu.pipeline_mode<synchronous>, transform_indices = @transform_3, window_bounds = array<i64: 16, 128>}, {transform_indices = @transform_4, window_bounds = array<i64: 1, 4, 640>}]} {
    %c0 = arith.constant 0 : index
    %c0_0 = arith.constant 0 : index
    %c0_1 = arith.constant 0 : index
    %0 = vector.load %arg1[%c0, %c0_0, %c0_1] : memref<1x4x17xf32, #tpu.memory_space<vmem>>, vector<1x4x17xf32>
    %1 = vector.shape_cast %0 : vector<1x4x17xf32> to vector<4x17xf32>
    %c0_2 = arith.constant 0 : index
    %c0_3 = arith.constant 0 : index
    %2 = vector.load %arg4[%c0_2, %c0_3] : memref<16x128xf32, #tpu.memory_space<vmem>>, vector<16x128xf32>
    %c0_4 = arith.constant 0 : index
    %c0_5 = arith.constant 0 : index
    %3 = vector.load %arg2[%c0_4, %c0_5] : memref<17x768xf32, #tpu.memory_space<vmem>>, vector<17x768xf32>
    %cst = arith.constant dense<0.000000e+00> : vector<4x768xf32>
    %4 = tpu.matmul %1, %3, %cst {dimension_numbers = #tpu.dot_dimension_numbers<[1], [0], [0], [1], [0, 0, 1, 1], [], []>} : vector<4x17xf32>, vector<17x768xf32>, vector<4x768xf32> -> vector<4x768xf32>
    %5 = vector.extract_strided_slice %4 {offsets = [0, 0], sizes = [4, 64], strides = [1, 1]} : vector<4x768xf32> to vector<4x64xf32>
    %6 = vector.extract_strided_slice %4 {offsets = [0, 128], sizes = [4, 64], strides = [1, 1]} : vector<4x768xf32> to vector<4x64xf32>
    %7 = vector.extract_strided_slice %4 {offsets = [0, 256], sizes = [4, 64], strides = [1, 1]} : vector<4x768xf32> to vector<4x64xf32>
    %8 = vector.extract_strided_slice %4 {offsets = [0, 384], sizes = [4, 96], strides = [1, 1]} : vector<4x768xf32> to vector<4x96xf32>
    %9 = vector.extract_strided_slice %4 {offsets = [0, 512], sizes = [4, 32], strides = [1, 1]} : vector<4x768xf32> to vector<4x32xf32>
    %cst_6 = arith.constant 0.000000e+00 : f32
    %10 = vector.broadcast %cst_6 : f32 to vector<4x32xf32>
    %11 = arith.maximumf %9, %10 : vector<4x32xf32>
    %12 = vector.extract_strided_slice %4 {offsets = [0, 640], sizes = [4, 64], strides = [1, 1]} : vector<4x768xf32> to vector<4x64xf32>
    %cst_7 = arith.constant dense<0.000000e+00> : vector<4x4xf32>
    %13 = tpu.matmul %5, %6, %cst_7 {dimension_numbers = #tpu.dot_dimension_numbers<[1], [1], [0], [0], [0, 0, 1, 0], [], []>} : vector<4x64xf32>, vector<4x64xf32>, vector<4x4xf32> -> vector<4x4xf32>
    %cst_8 = arith.constant 1.250000e-01 : f32
    %14 = vector.broadcast %cst_8 : f32 to vector<4x4xf32>
    %15 = arith.mulf %13, %14 : vector<4x4xf32>
    %cst_9 = arith.constant dense<0xFF800000> : vector<4xf32>
    %16 = vector.multi_reduction <maximumf>, %15, %cst_9 [1] : vector<4x4xf32> to vector<4xf32>
    %17 = vector.shape_cast %16 : vector<4xf32> to vector<4x1xf32>
    %18 = vector.broadcast %17 : vector<4x1xf32> to vector<4x4xf32>
    %19 = arith.subf %15, %18 : vector<4x4xf32>
    %20 = math.exp %19 : vector<4x4xf32>
    %cst_10 = arith.constant dense<0.000000e+00> : vector<4xf32>
    %21 = vector.multi_reduction <add>, %20, %cst_10 [1] : vector<4x4xf32> to vector<4xf32>
    %22 = vector.shape_cast %21 : vector<4xf32> to vector<4x1xf32>
    %23 = vector.broadcast %22 : vector<4x1xf32> to vector<4x4xf32>
    %24 = arith.divf %20, %23 : vector<4x4xf32>
    %cst_11 = arith.constant dense<0.000000e+00> : vector<4x64xf32>
    %25 = tpu.matmul %24, %7, %cst_11 {dimension_numbers = #tpu.dot_dimension_numbers<[1], [0], [0], [1], [0, 0, 1, 1], [], []>} : vector<4x4xf32>, vector<4x64xf32>, vector<4x64xf32> -> vector<4x64xf32>
    %c0_12 = arith.constant 0 : index
    %c0_13 = arith.constant 0 : index
    %26 = vector.load %arg3[%c0_12, %c0_13] : memref<288x128xf32, #tpu.memory_space<vmem>>, vector<64x32xf32>
    %cst_14 = arith.constant dense<0.000000e+00> : vector<4x32xf32>
    %27 = tpu.matmul %25, %26, %cst_14 {dimension_numbers = #tpu.dot_dimension_numbers<[1], [0], [0], [1], [0, 0, 1, 1], [], []>} : vector<4x64xf32>, vector<64x32xf32>, vector<4x32xf32> -> vector<4x32xf32>
    %28 = vector.extract_strided_slice %2 {offsets = [0, 0], sizes = [1, 32], strides = [1, 1]} : vector<16x128xf32> to vector<1x32xf32>
    %29 = vector.broadcast %28 : vector<1x32xf32> to vector<4x32xf32>
    %30 = arith.addf %27, %29 : vector<4x32xf32>
    %31 = vector.extract_strided_slice %2 {offsets = [3, 0], sizes = [1, 32], strides = [1, 1]} : vector<16x128xf32> to vector<1x32xf32>
    %32 = vector.broadcast %31 : vector<1x32xf32> to vector<4x32xf32>
    %33 = arith.mulf %11, %32 : vector<4x32xf32>
    %cst_15 = arith.constant dense<0.000000e+00> : vector<4xf32>
    %34 = vector.multi_reduction <add>, %33, %cst_15 [1] : vector<4x32xf32> to vector<4xf32>
    %35 = vector.shape_cast %34 : vector<4xf32> to vector<4x1xf32>
    %36 = vector.extract_strided_slice %2 {offsets = [4, 0], sizes = [1, 1], strides = [1, 1]} : vector<16x128xf32> to vector<1x1xf32>
    %37 = vector.broadcast %36 : vector<1x1xf32> to vector<4x1xf32>
    %38 = arith.addf %35, %37 : vector<4x1xf32>
    %cst_16 = arith.constant 5.000000e-01 : f32
    %39 = vector.broadcast %cst_16 : f32 to vector<4x1xf32>
    %40 = arith.mulf %39, %38 : vector<4x1xf32>
    %41 = math.tanh %40 : vector<4x1xf32>
    %cst_17 = arith.constant 5.000000e-01 : f32
    %42 = vector.broadcast %cst_17 : f32 to vector<4x1xf32>
    %43 = arith.mulf %42, %41 : vector<4x1xf32>
    %cst_18 = arith.constant 5.000000e-01 : f32
    %44 = vector.broadcast %cst_18 : f32 to vector<4x1xf32>
    %45 = arith.addf %43, %44 : vector<4x1xf32>
    %46 = vector.extract_strided_slice %2 {offsets = [1, 0], sizes = [1, 96], strides = [1, 1]} : vector<16x128xf32> to vector<1x96xf32>
    %47 = vector.extract_strided_slice %8 {offsets = [0, 0], sizes = [4, 32], strides = [1, 1]} : vector<4x96xf32> to vector<4x32xf32>
    %48 = vector.extract_strided_slice %46 {offsets = [0, 0], sizes = [1, 32], strides = [1, 1]} : vector<1x96xf32> to vector<1x32xf32>
    %49 = vector.broadcast %48 : vector<1x32xf32> to vector<4x32xf32>
    %50 = arith.addf %47, %49 : vector<4x32xf32>
    %cst_19 = arith.constant 5.000000e-01 : f32
    %51 = vector.broadcast %cst_19 : f32 to vector<4x32xf32>
    %52 = arith.mulf %51, %50 : vector<4x32xf32>
    %53 = math.tanh %52 : vector<4x32xf32>
    %cst_20 = arith.constant 5.000000e-01 : f32
    %54 = vector.broadcast %cst_20 : f32 to vector<4x32xf32>
    %55 = arith.mulf %54, %53 : vector<4x32xf32>
    %cst_21 = arith.constant 5.000000e-01 : f32
    %56 = vector.broadcast %cst_21 : f32 to vector<4x32xf32>
    %57 = arith.addf %55, %56 : vector<4x32xf32>
    %58 = vector.extract_strided_slice %8 {offsets = [0, 32], sizes = [4, 32], strides = [1, 1]} : vector<4x96xf32> to vector<4x32xf32>
    %59 = vector.extract_strided_slice %46 {offsets = [0, 32], sizes = [1, 32], strides = [1, 1]} : vector<1x96xf32> to vector<1x32xf32>
    %60 = vector.broadcast %59 : vector<1x32xf32> to vector<4x32xf32>
    %61 = arith.addf %58, %60 : vector<4x32xf32>
    %cst_22 = arith.constant 5.000000e-01 : f32
    %62 = vector.broadcast %cst_22 : f32 to vector<4x32xf32>
    %63 = arith.mulf %62, %61 : vector<4x32xf32>
    %64 = math.tanh %63 : vector<4x32xf32>
    %cst_23 = arith.constant 5.000000e-01 : f32
    %65 = vector.broadcast %cst_23 : f32 to vector<4x32xf32>
    %66 = arith.mulf %65, %64 : vector<4x32xf32>
    %cst_24 = arith.constant 5.000000e-01 : f32
    %67 = vector.broadcast %cst_24 : f32 to vector<4x32xf32>
    %68 = arith.addf %66, %67 : vector<4x32xf32>
    %69 = vector.extract_strided_slice %8 {offsets = [0, 64], sizes = [4, 32], strides = [1, 1]} : vector<4x96xf32> to vector<4x32xf32>
    %70 = vector.extract_strided_slice %46 {offsets = [0, 64], sizes = [1, 32], strides = [1, 1]} : vector<1x96xf32> to vector<1x32xf32>
    %71 = vector.broadcast %70 : vector<1x32xf32> to vector<4x32xf32>
    %72 = arith.mulf %57, %71 : vector<4x32xf32>
    %73 = arith.addf %69, %72 : vector<4x32xf32>
    %74 = math.tanh %73 : vector<4x32xf32>
    %cst_25 = arith.constant 1.000000e+00 : f32
    %75 = vector.broadcast %cst_25 : f32 to vector<4x32xf32>
    %76 = arith.subf %75, %68 : vector<4x32xf32>
    %77 = arith.mulf %76, %74 : vector<4x32xf32>
    %78 = vector.extract_strided_slice %2 {offsets = [2, 0], sizes = [1, 32], strides = [1, 1]} : vector<16x128xf32> to vector<1x32xf32>
    %79 = vector.broadcast %78 : vector<1x32xf32> to vector<4x32xf32>
    %80 = arith.mulf %68, %79 : vector<4x32xf32>
    %81 = arith.addf %77, %80 : vector<4x32xf32>
    %c64 = arith.constant 64 : index
    %c0_26 = arith.constant 0 : index
    %82 = vector.load %arg3[%c64, %c0_26] : memref<288x128xf32, #tpu.memory_space<vmem>>, vector<32x64xf32>
    %cst_27 = arith.constant dense<0.000000e+00> : vector<4x64xf32>
    %83 = tpu.matmul %81, %82, %cst_27 {dimension_numbers = #tpu.dot_dimension_numbers<[1], [0], [0], [1], [0, 0, 1, 1], [], []>} : vector<4x32xf32>, vector<32x64xf32>, vector<4x64xf32> -> vector<4x64xf32>
    %84 = vector.extract_strided_slice %2 {offsets = [6, 0], sizes = [1, 64], strides = [1, 1]} : vector<16x128xf32> to vector<1x64xf32>
    %85 = vector.broadcast %45 : vector<4x1xf32> to vector<4x64xf32>
    %86 = vector.broadcast %84 : vector<1x64xf32> to vector<4x64xf32>
    %87 = arith.mulf %85, %86 : vector<4x64xf32>
    %88 = arith.addf %83, %87 : vector<4x64xf32>
    %89 = vector.extract_strided_slice %2 {offsets = [5, 0], sizes = [1, 64], strides = [1, 1]} : vector<16x128xf32> to vector<1x64xf32>
    %90 = vector.broadcast %89 : vector<1x64xf32> to vector<4x64xf32>
    %91 = arith.addf %88, %90 : vector<4x64xf32>
    %cst_28 = arith.constant 0.000000e+00 : f32
    %92 = vector.broadcast %cst_28 : f32 to vector<4x64xf32>
    %93 = arith.maximumf %91, %92 : vector<4x64xf32>
    %c96 = arith.constant 96 : index
    %c0_29 = arith.constant 0 : index
    %94 = vector.load %arg3[%c96, %c0_29] : memref<288x128xf32, #tpu.memory_space<vmem>>, vector<64x32xf32>
    %cst_30 = arith.constant dense<0.000000e+00> : vector<4x32xf32>
    %95 = tpu.matmul %93, %94, %cst_30 {dimension_numbers = #tpu.dot_dimension_numbers<[1], [0], [0], [1], [0, 0, 1, 1], [], []>} : vector<4x64xf32>, vector<64x32xf32>, vector<4x32xf32> -> vector<4x32xf32>
    %96 = vector.extract_strided_slice %2 {offsets = [7, 0], sizes = [1, 32], strides = [1, 1]} : vector<16x128xf32> to vector<1x32xf32>
    %97 = vector.broadcast %96 : vector<1x32xf32> to vector<4x32xf32>
    %98 = arith.addf %95, %97 : vector<4x32xf32>
    %99 = math.tanh %98 : vector<4x32xf32>
    %100 = arith.addf %81, %99 : vector<4x32xf32>
    %cst_31 = arith.constant dense<0.000000e+00> : vector<4xf32>
    %101 = vector.multi_reduction <add>, %100, %cst_31 [1] : vector<4x32xf32> to vector<4xf32>
    %102 = vector.shape_cast %101 : vector<4xf32> to vector<4x1xf32>
    %cst_32 = arith.constant 3.200000e+01 : f32
    %103 = vector.broadcast %cst_32 : f32 to vector<4x1xf32>
    %104 = arith.divf %102, %103 : vector<4x1xf32>
    %105 = vector.broadcast %104 : vector<4x1xf32> to vector<4x32xf32>
    %106 = arith.subf %100, %105 : vector<4x32xf32>
    %107 = arith.mulf %106, %106 : vector<4x32xf32>
    %cst_33 = arith.constant dense<0.000000e+00> : vector<4xf32>
    %108 = vector.multi_reduction <add>, %107, %cst_33 [1] : vector<4x32xf32> to vector<4xf32>
    %109 = vector.shape_cast %108 : vector<4xf32> to vector<4x1xf32>
    %cst_34 = arith.constant 3.200000e+01 : f32
    %110 = vector.broadcast %cst_34 : f32 to vector<4x1xf32>
    %111 = arith.divf %109, %110 : vector<4x1xf32>
    %cst_35 = arith.constant 9.99999974E-6 : f32
    %112 = vector.broadcast %cst_35 : f32 to vector<4x1xf32>
    %113 = arith.addf %111, %112 : vector<4x1xf32>
    %114 = math.rsqrt %113 : vector<4x1xf32>
    %115 = vector.broadcast %114 : vector<4x1xf32> to vector<4x32xf32>
    %116 = arith.mulf %106, %115 : vector<4x32xf32>
    %117 = vector.extract_strided_slice %2 {offsets = [8, 0], sizes = [1, 32], strides = [1, 1]} : vector<16x128xf32> to vector<1x32xf32>
    %118 = vector.broadcast %117 : vector<1x32xf32> to vector<4x32xf32>
    %119 = arith.mulf %116, %118 : vector<4x32xf32>
    %120 = vector.extract_strided_slice %2 {offsets = [9, 0], sizes = [1, 32], strides = [1, 1]} : vector<16x128xf32> to vector<1x32xf32>
    %121 = vector.broadcast %120 : vector<1x32xf32> to vector<4x32xf32>
    %122 = arith.addf %119, %121 : vector<4x32xf32>
    %c160 = arith.constant 160 : index
    %c0_36 = arith.constant 0 : index
    %123 = vector.load %arg3[%c160, %c0_36] : memref<288x128xf32, #tpu.memory_space<vmem>>, vector<32x64xf32>
    %cst_37 = arith.constant dense<0.000000e+00> : vector<4x64xf32>
    %124 = tpu.matmul %122, %123, %cst_37 {dimension_numbers = #tpu.dot_dimension_numbers<[1], [0], [0], [1], [0, 0, 1, 1], [], []>} : vector<4x32xf32>, vector<32x64xf32>, vector<4x64xf32> -> vector<4x64xf32>
    %125 = arith.addf %124, %12 : vector<4x64xf32>
    %126 = vector.extract_strided_slice %2 {offsets = [10, 0], sizes = [1, 64], strides = [1, 1]} : vector<16x128xf32> to vector<1x64xf32>
    %127 = vector.broadcast %126 : vector<1x64xf32> to vector<4x64xf32>
    %128 = arith.addf %125, %127 : vector<4x64xf32>
    %cst_38 = arith.constant 0.000000e+00 : f32
    %129 = vector.broadcast %cst_38 : f32 to vector<4x64xf32>
    %130 = arith.maximumf %128, %129 : vector<4x64xf32>
    %c192 = arith.constant 192 : index
    %c0_39 = arith.constant 0 : index
    %131 = vector.load %arg3[%c192, %c0_39] : memref<288x128xf32, #tpu.memory_space<vmem>>, vector<64x32xf32>
    %cst_40 = arith.constant dense<0.000000e+00> : vector<4x32xf32>
    %132 = tpu.matmul %130, %131, %cst_40 {dimension_numbers = #tpu.dot_dimension_numbers<[1], [0], [0], [1], [0, 0, 1, 1], [], []>} : vector<4x64xf32>, vector<64x32xf32>, vector<4x32xf32> -> vector<4x32xf32>
    %133 = vector.extract_strided_slice %2 {offsets = [11, 0], sizes = [1, 32], strides = [1, 1]} : vector<16x128xf32> to vector<1x32xf32>
    %134 = vector.broadcast %133 : vector<1x32xf32> to vector<4x32xf32>
    %135 = arith.addf %132, %134 : vector<4x32xf32>
    %cst_41 = arith.constant 0.000000e+00 : f32
    %136 = vector.broadcast %cst_41 : f32 to vector<4x32xf32>
    %137 = arith.maximumf %135, %136 : vector<4x32xf32>
    %c256 = arith.constant 256 : index
    %c0_42 = arith.constant 0 : index
    %138 = vector.load %arg3[%c256, %c0_42] : memref<288x128xf32, #tpu.memory_space<vmem>>, vector<32x4xf32>
    %cst_43 = arith.constant dense<0.000000e+00> : vector<4x4xf32>
    %139 = tpu.matmul %137, %138, %cst_43 {dimension_numbers = #tpu.dot_dimension_numbers<[1], [0], [0], [1], [0, 0, 1, 1], [], []>} : vector<4x32xf32>, vector<32x4xf32>, vector<4x4xf32> -> vector<4x4xf32>
    %140 = vector.extract_strided_slice %2 {offsets = [12, 0], sizes = [1, 4], strides = [1, 1]} : vector<16x128xf32> to vector<1x4xf32>
    %141 = vector.broadcast %140 : vector<1x4xf32> to vector<4x4xf32>
    %142 = arith.addf %139, %141 : vector<4x4xf32>
    %cst_44 = arith.constant dense<0xFF800000> : vector<4xf32>
    %143 = vector.multi_reduction <maximumf>, %142, %cst_44 [1] : vector<4x4xf32> to vector<4xf32>
    %144 = vector.shape_cast %143 : vector<4xf32> to vector<4x1xf32>
    %145 = vector.broadcast %144 : vector<4x1xf32> to vector<4x4xf32>
    %146 = arith.subf %142, %145 : vector<4x4xf32>
    %147 = math.exp %146 : vector<4x4xf32>
    %cst_45 = arith.constant dense<0.000000e+00> : vector<4xf32>
    %148 = vector.multi_reduction <add>, %147, %cst_45 [1] : vector<4x4xf32> to vector<4xf32>
    %149 = vector.shape_cast %148 : vector<4xf32> to vector<4x1xf32>
    %150 = vector.broadcast %149 : vector<4x1xf32> to vector<4x4xf32>
    %151 = arith.divf %147, %150 : vector<4x4xf32>
    %152 = vector.extract_strided_slice %2 {offsets = [13, 0], sizes = [1, 4], strides = [1, 1]} : vector<16x128xf32> to vector<1x4xf32>
    %153 = vector.broadcast %152 : vector<1x4xf32> to vector<4x4xf32>
    %154 = arith.mulf %151, %153 : vector<4x4xf32>
    %cst_46 = arith.constant dense<0.000000e+00> : vector<4xf32>
    %155 = vector.multi_reduction <add>, %154, %cst_46 [1] : vector<4x4xf32> to vector<4xf32>
    %156 = vector.shape_cast %155 : vector<4xf32> to vector<4x1xf32>
    %157 = arith.addf %30, %122 : vector<4x32xf32>
    %c0_47 = arith.constant 0 : index
    %c0_48 = arith.constant 0 : index
    %c0_49 = arith.constant 0 : index
    %158 = vector.load %arg5[%c0_47, %c0_48, %c0_49] : memref<1x4x640xf32, #tpu.memory_space<vmem>>, vector<1x4x32xf32>
    %159 = vector.shape_cast %158 : vector<1x4x32xf32> to vector<4x32xf32>
    %160 = vector.shape_cast %157 : vector<4x32xf32> to vector<1x4x32xf32>
    tpu.vector_store %arg5[%c0_47, %c0_48, %c0_49], %160 {strides = array<i32>} : memref<1x4x640xf32, #tpu.memory_space<vmem>>, vector<1x4x32xf32>,
    %c0_50 = arith.constant 0 : index
    %c0_51 = arith.constant 0 : index
    %c128 = arith.constant 128 : index
    %161 = vector.load %arg5[%c0_50, %c0_51, %c128] : memref<1x4x640xf32, #tpu.memory_space<vmem>>, vector<1x4x4xf32>
    %162 = vector.shape_cast %161 : vector<1x4x4xf32> to vector<4x4xf32>
    %163 = vector.shape_cast %24 : vector<4x4xf32> to vector<1x4x4xf32>
    tpu.vector_store %arg5[%c0_50, %c0_51, %c128], %163 {strides = array<i32>} : memref<1x4x640xf32, #tpu.memory_space<vmem>>, vector<1x4x4xf32>,
    %c0_52 = arith.constant 0 : index
    %c0_53 = arith.constant 0 : index
    %c256_54 = arith.constant 256 : index
    %164 = vector.load %arg5[%c0_52, %c0_53, %c256_54] : memref<1x4x640xf32, #tpu.memory_space<vmem>>, vector<1x4x4xf32>
    %165 = vector.shape_cast %164 : vector<1x4x4xf32> to vector<4x4xf32>
    %166 = vector.shape_cast %151 : vector<4x4xf32> to vector<1x4x4xf32>
    tpu.vector_store %arg5[%c0_52, %c0_53, %c256_54], %166 {strides = array<i32>} : memref<1x4x640xf32, #tpu.memory_space<vmem>>, vector<1x4x4xf32>,
    %c0_55 = arith.constant 0 : index
    %c0_56 = arith.constant 0 : index
    %c384 = arith.constant 384 : index
    %167 = vector.load %arg5[%c0_55, %c0_56, %c384] : memref<1x4x640xf32, #tpu.memory_space<vmem>>, vector<1x4x1xf32>
    %168 = vector.shape_cast %167 : vector<1x4x1xf32> to vector<4x1xf32>
    %169 = vector.shape_cast %45 : vector<4x1xf32> to vector<1x4x1xf32>
    tpu.vector_store %arg5[%c0_55, %c0_56, %c384], %169 {strides = array<i32>} : memref<1x4x640xf32, #tpu.memory_space<vmem>>, vector<1x4x1xf32>,
    %c0_57 = arith.constant 0 : index
    %c0_58 = arith.constant 0 : index
    %c512 = arith.constant 512 : index
    %170 = vector.load %arg5[%c0_57, %c0_58, %c512] : memref<1x4x640xf32, #tpu.memory_space<vmem>>, vector<1x4x1xf32>
    %171 = vector.shape_cast %170 : vector<1x4x1xf32> to vector<4x1xf32>
    %172 = vector.shape_cast %156 : vector<4x1xf32> to vector<1x4x1xf32>
    tpu.vector_store %arg5[%c0_57, %c0_58, %c512], %172 {strides = array<i32>} : memref<1x4x640xf32, #tpu.memory_space<vmem>>, vector<1x4x1xf32>,
    return
  }
  func.func @transform_0(%arg0: i32) -> (i32, i32, i32) {
    %c0_i32 = arith.constant 0 : i32
    %c0_i32_0 = arith.constant 0 : i32
    %c0_i32_1 = arith.constant 0 : i32
    return %arg0, %c0_i32, %c0_i32_0 : i32, i32, i32
  }
  func.func @transform_1(%arg0: i32) -> (i32, i32) {
    %c0_i32 = arith.constant 0 : i32
    %c0_i32_0 = arith.constant 0 : i32
    %c0_i32_1 = arith.constant 0 : i32
    return %c0_i32, %c0_i32_0 : i32, i32
  }
  func.func @transform_2(%arg0: i32) -> (i32, i32) {
    %c0_i32 = arith.constant 0 : i32
    %c0_i32_0 = arith.constant 0 : i32
    %c0_i32_1 = arith.constant 0 : i32
    return %c0_i32, %c0_i32_0 : i32, i32
  }
  func.func @transform_3(%arg0: i32) -> (i32, i32) {
    %c0_i32 = arith.constant 0 : i32
    %c0_i32_0 = arith.constant 0 : i32
    %c0_i32_1 = arith.constant 0 : i32
    return %c0_i32, %c0_i32_0 : i32, i32
  }
  func.func @transform_4(%arg0: i32) -> (i32, i32, i32) {
    %c0_i32 = arith.constant 0 : i32
    %c0_i32_0 = arith.constant 0 : i32
    %c0_i32_1 = arith.constant 0 : i32
    return %arg0, %c0_i32, %c0_i32_0 : i32, i32, i32
  }
}

</mosaic_0001>

<llo_original>
// kernel: mindfulness_forward.1
$region0: #{mindfulness_forward.1}
  #allocation0 [shape = 'u32[]', space=smem, size = 0x4, offset = 0x4, fixed_abs, tag = 'smem constant byte address 0x4 - core index']
  #allocation1 [shape = 'u32[144,128]{1,0:T(1,128)}', space=vmem, size = 0x12000, scoped, tag = 'internal scratch']
  %s0 = inlined_call_operand.vmem [shape: f32[1,4,17], index: 0, kind: input, shape index: {}]
  %s1 = inlined_call_operand.hbm [shape: f32[17,768], index: 1, kind: input, shape index: {}]
  %s2 = inlined_call_operand.hbm [shape: f32[288,128], index: 2, kind: input, shape index: {}]
  %s3 = inlined_call_operand.vmem [shape: f32[16,128], index: 3, kind: input, shape index: {}]
  %s4 = inlined_call_operand.vmem [shape: f32[1,4,640], index: 4, kind: output, shape index: {}]
  %s5 = sld [smem:[#allocation0]]
  $region34: #{mindfulness_forward.1} parent=0
    _
  %s7 = ssub.s32 1, %s5
  %s8 = scalar_select 0, %s7, %s5
  $region1: #{mindfulness_forward.1} parent=0
    #allocation2 [shape = 'u8[73728]{0}', space=vmem, size = 0x12000, scoped, tag = 'input window, operand 1, single buffered']
    #allocation3 [shape = 's32[1]{0}', space=sflag, size = 0x4, scoped, tag = 'scoped memory for mindfulness_forward.1']
    #allocation4 [shape = 'u8[147456]{0}', space=vmem, size = 0x24000, scoped, tag = 'input window, operand 2, single buffered']
    #allocation5 [shape = 's32[1]{0}', space=sflag, size = 0x4, scoped, tag = 'scoped memory for mindfulness_forward.1']
    %9 = vsyncpa [#allocation3], 0
    %10 = vsyncpa [#allocation5], 0
    // Predicated region
    $region2: #{mindfulness_forward.1} parent=1 // pred_check
      _
    $region3: #{mindfulness_forward.1} parent=1 // pred_check_branch
      %12 = sbr.rel (0) target = $region5
    $region4: #{mindfulness_forward.1} parent=1 // pred_region
      _
    $region5: #{mindfulness_forward.1} parent=1 // pred_fallthru
      _
    // Predicated region
    $region6: #{mindfulness_forward.1} parent=1 // pred_check
      _
    $region7: #{mindfulness_forward.1} parent=1 // pred_check_branch
      %14 = sbr.rel (0) target = $region9
    $region8: #{mindfulness_forward.1} parent=1 // pred_region
      %s16 = ssub.s32 2304, 2304
      %17 = vsyncadd [#allocation3], %s16
      %s18 = sshll.u32 [#allocation2], 4
      %s19 = int_to_ptr.vmem [resolvable:$true] %s18
      %24 = dma.hbm_to_vmem [thread:$0]  %s1, 2304, %s19, [#allocation3], 768, 768, 48
    $region9: #{mindfulness_forward.1} parent=1 // pred_fallthru
      _
    // Predicated region
    $region10: #{mindfulness_forward.1} parent=1 // pred_check
      _
    $region11: #{mindfulness_forward.1} parent=1 // pred_check_branch
      %26 = sbr.rel (0) target = $region13
    $region12: #{mindfulness_forward.1} parent=1 // pred_region
      %s28 = ssub.s32 4608, 4608
      %29 = vsyncadd [#allocation5], %s28
      %s30 = sshll.u32 [#allocation4], 4
      %s31 = int_to_ptr.vmem [resolvable:$true] %s30
      %36 = dma.hbm_to_vmem [thread:$0]  %s2, 4608, %s31, [#allocation5], 128, 128, 8
    $region13: #{mindfulness_forward.1} parent=1 // pred_fallthru
      _
    // Predicated region
    $region14: #{mindfulness_forward.1} parent=1 // pred_check
      _
    $region15: #{mindfulness_forward.1} parent=1 // pred_check_branch
      %38 = sbr.rel (0) target = $region17
    $region16: #{mindfulness_forward.1} parent=1 // pred_region
      _
    $region17: #{mindfulness_forward.1} parent=1 // pred_fallthru
      _
    // Predicated region
    $region18: #{mindfulness_forward.1} parent=1 // pred_check
      _
    $region19: #{mindfulness_forward.1} parent=1 // pred_check_branch
      %40 = sbr.rel (0) target = $region21
    $region20: #{mindfulness_forward.1} parent=1 // pred_region
      %41 = dma.done [#allocation3], 2304
    $region21: #{mindfulness_forward.1} parent=1 // pred_fallthru
      _
    // Predicated region
    $region22: #{mindfulness_forward.1} parent=1 // pred_check
      _
    $region23: #{mindfulness_forward.1} parent=1 // pred_check_branch
      %43 = sbr.rel (0) target = $region25
    $region24: #{mindfulness_forward.1} parent=1 // pred_region
      %44 = dma.done [#allocation5], 4608
    $region25: #{mindfulness_forward.1} parent=1 // pred_fallthru
      _
    %v45 = vld [vmem:[%s0] sm:$0xf]
    %v46 = vld [vmem:[%s3] sm:$0xff]
    %v47 = vld [vmem:[%s3 + $0x8] sm:$0xff]
    %v48 = vld [vmem:[#allocation2] sm:$0xff]
    %v49 = vld [vmem:[#allocation2 + $0x8] sm:$0xff]
    %v50 = vld [vmem:[#allocation2 + $0x10] sm:$0xff]
    %v51 = vld [vmem:[#allocation2 + $0x18] sm:$0xff]
    %v52 = vld [vmem:[#allocation2 + $0x20] sm:$0xff]
    %v53 = vld [vmem:[#allocation2 + $0x28] sm:$0xff]
    %v54 = vld [vmem:[#allocation2 + $0x30] sm:$0xff]
    %v55 = vld [vmem:[#allocation2 + $0x38] sm:$0xff]
    %v56 = vld [vmem:[#allocation2 + $0x40] sm:$0xff]
    %v57 = vld [vmem:[#allocation2 + $0x48] sm:$0xff]
    %v58 = vld [vmem:[#allocation2 + $0x50] sm:$0xff]
    %v59 = vld [vmem:[#allocation2 + $0x58] sm:$0xff]
    %v60 = vld [vmem:[#allocation2 + $0x60] sm:$0x1]
    %v61 = vld [vmem:[#allocation2 + $0x68] sm:$0x1]
    %v62 = vld [vmem:[#allocation2 + $0x70] sm:$0x1]
    %v63 = vld [vmem:[#allocation2 + $0x78] sm:$0x1]
    %v64 = vld [vmem:[#allocation2 + $0x80] sm:$0x1]
    %v65 = vld [vmem:[#allocation2 + $0x88] sm:$0x1]
    %vm66 = vcmask 138240
    %v68 = vsel %vm66, %v45, 0
    %vm70 = vcmask 1040384
    %v72 = vsel %vm70, %v60, 0
    %v75 = vsel %vm70, %v61, 0
    %v78 = vsel %vm70, %v62, 0
    %v81 = vsel %vm70, %v63, 0
    %v84 = vsel %vm70, %v64, 0
    %v87 = vsel %vm70, %v65, 0
    %89 = vmatprep.subr.mxu0 %v49
    %90 = vmatpush1.msra.mxu0 %v48
    %91 = vmatprep.subr.mxu0 %v55
    %92 = vmatpush1.msra.mxu0 %v54
    %93 = vmatprep.subr.mxu0 %v75
    %94 = vmatpush1.msra.mxu0 %v72
    %95 = vmatprep.subr.mxu0 0.0
    %96 = vmatpush1.msra.mxu0 0.0
    %97 = vmatprep.subr.mxu0 0.0
    %98 = vmatpush1.msra.mxu0 0.0
    %99 = vmatprep.subr.mxu0 0.0
    %100 = vmatpush1.msra.mxu0 0.0
    %101 = vmatprep.subr.mxu0 0.0
    %102 = vmatpush1.msra.mxu0 0.0
    %103 = vmatprep.subr.mxu0 0.0
    %104 = vmatpush1.msra.mxu0 0.0
    %105 = vmatprep.subr.mxu0 0.0
    %106 = vmatpush1.msra.mxu0 0.0
    %107 = vmatprep.subr.mxu0 0.0
    %108 = vmatpush1.msra.mxu0 0.0
    %109 = vmatprep.subr.mxu0 0.0
    %110 = vmatpush1.msra.mxu0 0.0
    %111 = vmatprep.subr.mxu0 0.0
    %112 = vmatpush1.msra.mxu0 0.0
    %113 = vmatprep.subr.mxu0 0.0
    %114 = vmatpush1.msra.mxu0 0.0
    %115 = vmatprep.subr.mxu0 0.0
    %116 = vmatpush1.msra.mxu0 0.0
    %117 = vmatprep.subr.mxu0 0.0
    %118 = vmatpush1.msra.mxu0 0.0
    %119 = vmatprep.subr.mxu0 0.0
    %120 = vmatpush1.msra.mxu0 0.0
    %121 = vmatprep.subr.mxu0 0.0
    %122 = vmatpush1.msra.mxu0 0.0
    %123 = vmatprep.subr.mxu0 0.0
    %124 = vmatpush1.msra.mxu0 0.0
    %125 = vmatprep.subr.mxu0 0.0
    %126 = vmatpush1.msra.mxu0 0.0
    %127 = vmatprep.subr.mxu0 0.0
    %128 = vmatpush1.msra.mxu0 0.0
    %129 = vmatprep.subr.mxu0 0.0
    %130 = vmatpush1.msra.mxu0 0.0
    %131 = vmatprep.subr.mxu0 0.0
    %132 = vmatpush1.msra.mxu0 0.0
    %133 = vmatprep.subr.mxu0 0.0
    %134 = vmatpush1.msra.mxu0 0.0
    %135 = vmatprep.subr.mxu0 0.0
    %136 = vmatpush1.msra.mxu0 0.0
    %137 = vmatprep.subr.mxu0 0.0
    %138 = vmatpush1.msra.mxu0 0.0
    %139 = vmatprep.subr.mxu0 0.0
    %140 = vmatpush1.msra.mxu0 0.0
    %141 = vmatprep.subr.mxu0 0.0
    %142 = vmatpush1.msra.mxu0 0.0
    %143 = vmatprep.subr.mxu0 0.0
    %144 = vmatpush1.msra.mxu0 0.0
    %145 = vmatprep.subr.mxu0 0.0
    %146 = vmatpush1.msra.mxu0 0.0
    %147 = vmatprep.subr.mxu0 0.0
    %148 = vmatpush1.msra.mxu0 0.0
    %149 = vmatprep.subr.mxu0 0.0
    %150 = vmatpush1.msra.mxu0 0.0
    %151 = vmatprep.subr.mxu0 0.0
    %152 = vmatpush1.msra.mxu0 0.0
    %153 = vmatprep.mubr.f32.mxu0 0.0
    %154 = vmatmul.mubr.f32.gmra.mrb[0].mxu0 %v68
    %v155 = vpop.f32.mrb[0].mxu0
    %v156 = vadd.f32 0.0, %v155
    %v157 = vpop.f32.mrb[0].mxu0
    %v158 = vadd.f32 0.0, %v157
    %159 = vdwg.mxu0
    %160 = vmatprep.subr.mxu0 %v51
    %161 = vmatpush1.msra.mxu0 %v50
    %162 = vmatprep.subr.mxu0 %v57
    %163 = vmatpush1.msra.mxu0 %v56
    %164 = vmatprep.subr.mxu0 %v81
    %165 = vmatpush1.msra.mxu0 %v78
    %166 = vmatprep.subr.mxu0 0.0
    %167 = vmatpush1.msra.mxu0 0.0
    %168 = vmatprep.subr.mxu0 0.0
    %169 = vmatpush1.msra.mxu0 0.0
    %170 = vmatprep.subr.mxu0 0.0
    %171 = vmatpush1.msra.mxu0 0.0
    %172 = vmatprep.subr.mxu0 0.0
    %173 = vmatpush1.msra.mxu0 0.0
    %174 = vmatprep.subr.mxu0 0.0
    %175 = vmatpush1.msra.mxu0 0.0
    %176 = vmatprep.subr.mxu0 0.0
    %177 = vmatpush1.msra.mxu0 0.0
    %178 = vmatprep.subr.mxu0 0.0
    %179 = vmatpush1.msra.mxu0 0.0
    %180 = vmatprep.subr.mxu0 0.0
    %181 = vmatpush1.msra.mxu0 0.0
    %182 = vmatprep.subr.mxu0 0.0
    %183 = vmatpush1.msra.mxu0 0.0
    %184 = vmatprep.subr.mxu0 0.0
    %185 = vmatpush1.msra.mxu0 0.0
    %186 = vmatprep.subr.mxu0 0.0
    %187 = vmatpush1.msra.mxu0 0.0
    %188 = vmatprep.subr.mxu0 0.0
    %189 = vmatpush1.msra.mxu0 0.0
    %190 = vmatprep.subr.mxu0 0.0
    %191 = vmatpush1.msra.mxu0 0.0
    %192 = vmatprep.subr.mxu0 0.0
    %193 = vmatpush1.msra.mxu0 0.0
    %194 = vmatprep.subr.mxu0 0.0
    %195 = vmatpush1.msra.mxu0 0.0
    %196 = vmatprep.subr.mxu0 0.0
    %197 = vmatpush1.msra.mxu0 0.0
    %198 = vmatprep.subr.mxu0 0.0
    %199 = vmatpush1.msra.mxu0 0.0
    %200 = vmatprep.subr.mxu0 0.0
    %201 = vmatpush1.msra.mxu0 0.0
    %202 = vmatprep.subr.mxu0 0.0
    %203 = vmatpush1.msra.mxu0 0.0
    %204 = vmatprep.subr.mxu0 0.0
    %205 = vmatpush1.msra.mxu0 0.0
    %206 = vmatprep.subr.mxu0 0.0
    %207 = vmatpush1.msra.mxu0 0.0
    %208 = vmatprep.subr.mxu0 0.0
    %209 = vmatpush1.msra.mxu0 0.0
    %210 = vmatprep.subr.mxu0 0.0
    %211 = vmatpush1.msra.mxu0 0.0
    %212 = vmatprep.subr.mxu0 0.0
    %213 = vmatpush1.msra.mxu0 0.0
    %214 = vmatprep.subr.mxu0 0.0
    %215 = vmatpush1.msra.mxu0 0.0
    %216 = vmatprep.subr.mxu0 0.0
    %217 = vmatpush1.msra.mxu0 0.0
    %218 = vmatprep.subr.mxu0 0.0
    %219 = vmatpush1.msra.mxu0 0.0
    %220 = vmatprep.subr.mxu0 0.0
    %221 = vmatpush1.msra.mxu0 0.0
    %222 = vmatprep.subr.mxu0 0.0
    %223 = vmatpush1.msra.mxu0 0.0
    %224 = vmatprep.mubr.f32.mxu0 0.0
    %225 = vmatmul.mubr.f32.gmra.mrb[0].mxu0 %v68
    %v226 = vpop.f32.mrb[0].mxu0
    %v227 = vadd.f32 0.0, %v226
    %v228 = vpop.f32.mrb[0].mxu0
    %v229 = vadd.f32 0.0, %v228
    %230 = vdwg.mxu0
    %231 = vmatprep.subr.mxu0 %v53
    %232 = vmatpush1.msra.mxu0 %v52
    %233 = vmatprep.subr.mxu0 %v59
    %234 = vmatpush1.msra.mxu0 %v58
    %235 = vmatprep.subr.mxu0 %v87
    %236 = vmatpush1.msra.mxu0 %v84
    %237 = vmatprep.subr.mxu0 0.0
    %238 = vmatpush1.msra.mxu0 0.0
    %239 = vmatprep.subr.mxu0 0.0
    %240 = vmatpush1.msra.mxu0 0.0
    %241 = vmatprep.subr.mxu0 0.0
    %242 = vmatpush1.msra.mxu0 0.0
    %243 = vmatprep.subr.mxu0 0.0
    %244 = vmatpush1.msra.mxu0 0.0
    %245 = vmatprep.subr.mxu0 0.0
    %246 = vmatpush1.msra.mxu0 0.0
    %247 = vmatprep.subr.mxu0 0.0
    %248 = vmatpush1.msra.mxu0 0.0
    %249 = vmatprep.subr.mxu0 0.0
    %250 = vmatpush1.msra.mxu0 0.0
    %251 = vmatprep.subr.mxu0 0.0
    %252 = vmatpush1.msra.mxu0 0.0
    %253 = vmatprep.subr.mxu0 0.0
    %254 = vmatpush1.msra.mxu0 0.0
    %255 = vmatprep.subr.mxu0 0.0
    %256 = vmatpush1.msra.mxu0 0.0
    %257 = vmatprep.subr.mxu0 0.0
    %258 = vmatpush1.msra.mxu0 0.0
    %259 = vmatprep.subr.mxu0 0.0
    %260 = vmatpush1.msra.mxu0 0.0
    %261 = vmatprep.subr.mxu0 0.0
    %262 = vmatpush1.msra.mxu0 0.0
    %263 = vmatprep.subr.mxu0 0.0
    %264 = vmatpush1.msra.mxu0 0.0
    %265 = vmatprep.subr.mxu0 0.0
    %266 = vmatpush1.msra.mxu0 0.0
    %267 = vmatprep.subr.mxu0 0.0
    %268 = vmatpush1.msra.mxu0 0.0
    %269 = vmatprep.subr.mxu0 0.0
    %270 = vmatpush1.msra.mxu0 0.0
    %271 = vmatprep.subr.mxu0 0.0
    %272 = vmatpush1.msra.mxu0 0.0
    %273 = vmatprep.subr.mxu0 0.0
    %274 = vmatpush1.msra.mxu0 0.0
    %275 = vmatprep.subr.mxu0 0.0
    %276 = vmatpush1.msra.mxu0 0.0
    %277 = vmatprep.subr.mxu0 0.0
    %278 = vmatpush1.msra.mxu0 0.0
    %279 = vmatprep.subr.mxu0 0.0
    %280 = vmatpush1.msra.mxu0 0.0
    %281 = vmatprep.subr.mxu0 0.0
    %282 = vmatpush1.msra.mxu0 0.0
    %283 = vmatprep.subr.mxu0 0.0
    %284 = vmatpush1.msra.mxu0 0.0
    %285 = vmatprep.subr.mxu0 0.0
    %286 = vmatpush1.msra.mxu0 0.0
    %287 = vmatprep.subr.mxu0 0.0
    %288 = vmatpush1.msra.mxu0 0.0
    %289 = vmatprep.subr.mxu0 0.0
    %290 = vmatpush1.msra.mxu0 0.0
    %291 = vmatprep.subr.mxu0 0.0
    %292 = vmatpush1.msra.mxu0 0.0
    %293 = vmatprep.subr.mxu0 0.0
    %294 = vmatpush1.msra.mxu0 0.0
    %295 = vmatprep.mubr.f32.mxu0 0.0
    %296 = vmatmul.mubr.f32.gmra.mrb[0].mxu0 %v68
    %v297 = vpop.f32.mrb[0].mxu0
    %v298 = vadd.f32 0.0, %v297
    %v299 = vpop.f32.mrb[0].mxu0
    %v300 = vadd.f32 0.0, %v299
    %301 = vdwg.mxu0
    %v302 = vmax.f32 %v298, 0.0
    %vm303 = vcmask 523264
    %v305 = vsel %vm303, %v156, 0
    %v308 = vsel %vm303, %v158, 0
    %310 = vmatprep.subr.mxu0 0.0
    %311 = vmatpush1.xpose.msra.mxu0 %v308
    %312 = vmatprep.subr.mxu0 0.0
    %313 = vmatpush1.xpose.msra.mxu0 0.0
    %314 = vmatprep.subr.mxu0 0.0
    %315 = vmatpush1.xpose.msra.mxu0 0.0
    %316 = vmatprep.subr.mxu0 0.0
    %317 = vmatpush1.xpose.msra.mxu0 0.0
    %318 = vmatprep.subr.mxu0 0.0
    %319 = vmatpush1.xpose.msra.mxu0 0.0
    %320 = vmatprep.subr.mxu0 0.0
    %321 = vmatpush1.xpose.msra.mxu0 0.0
    %322 = vmatprep.subr.mxu0 0.0
    %323 = vmatpush1.xpose.msra.mxu0 0.0
    %324 = vmatprep.subr.mxu0 0.0
    %325 = vmatpush1.xpose.msra.mxu0 0.0
    %326 = vmatprep.subr.mxu0 0.0
    %327 = vmatpush1.xpose.msra.mxu0 0.0
    %328 = vmatprep.subr.mxu0 0.0
    %329 = vmatpush1.xpose.msra.mxu0 0.0
    %330 = vmatprep.subr.mxu0 0.0
    %331 = vmatpush1.xpose.msra.mxu0 0.0
    %332 = vmatprep.subr.mxu0 0.0
    %333 = vmatpush1.xpose.msra.mxu0 0.0
    %334 = vmatprep.subr.mxu0 0.0
    %335 = vmatpush1.xpose.msra.mxu0 0.0
    %336 = vmatprep.subr.mxu0 0.0
    %337 = vmatpush1.xpose.msra.mxu0 0.0
    %338 = vmatprep.subr.mxu0 0.0
    %339 = vmatpush1.xpose.msra.mxu0 0.0
    %340 = vmatprep.subr.mxu0 0.0
    %341 = vmatpush1.xpose.msra.mxu0 0.0
    %342 = vmatprep.subr.mxu0 0.0
    %343 = vmatpush1.xpose.msra.mxu0 0.0
    %344 = vmatprep.subr.mxu0 0.0
    %345 = vmatpush1.xpose.msra.mxu0 0.0
    %346 = vmatprep.subr.mxu0 0.0
    %347 = vmatpush1.xpose.msra.mxu0 0.0
    %348 = vmatprep.subr.mxu0 0.0
    %349 = vmatpush1.xpose.msra.mxu0 0.0
    %350 = vmatprep.subr.mxu0 0.0
    %351 = vmatpush1.xpose.msra.mxu0 0.0
    %352 = vmatprep.subr.mxu0 0.0
    %353 = vmatpush1.xpose.msra.mxu0 0.0
    %354 = vmatprep.subr.mxu0 0.0
    %355 = vmatpush1.xpose.msra.mxu0 0.0
    %356 = vmatprep.subr.mxu0 0.0
    %357 = vmatpush1.xpose.msra.mxu0 0.0
    %358 = vmatprep.subr.mxu0 0.0
    %359 = vmatpush1.xpose.msra.mxu0 0.0
    %360 = vmatprep.subr.mxu0 0.0
    %361 = vmatpush1.xpose.msra.mxu0 0.0
    %362 = vmatprep.subr.mxu0 0.0
    %363 = vmatpush1.xpose.msra.mxu0 0.0
    %364 = vmatprep.subr.mxu0 0.0
    %365 = vmatpush1.xpose.msra.mxu0 0.0
    %366 = vmatprep.subr.mxu0 0.0
    %367 = vmatpush1.xpose.msra.mxu0 0.0
    %368 = vmatprep.subr.mxu0 0.0
    %369 = vmatpush1.xpose.msra.mxu0 0.0
    %370 = vmatprep.subr.mxu0 0.0
    %371 = vmatpush1.xpose.msra.mxu0 0.0
    %372 = vmatprep.subr.mxu0 0.0
    %373 = vmatpush1.xpose.msra.mxu0 0.0
    %374 = vmatprep.mubr.f32.mxu0 0.0
    %375 = vmatmul.mubr.f32.gmra.mrb[0].mxu0 %v305
    %v376 = vpop.f32.mrb[0].mxu0
    %v377 = vadd.f32 0.0, %v376
    %v378 = vpop.f32.mrb[0].mxu0
    %379 = vdwg.mxu0
    %v380 = vmul.f32 %v377, 0.125
    %vm381 = vcmask 27648
    %v382 = vsel %vm381, %v380, -inf
    %383 = vmax.xlane.f32.xlu0 %v382
    %v384 = vpop.xlane.xlu0 %383
    %v385 = vsub.f32 %v380, %v384
    %v386 = vmul.f32 %v385, 1.442695
    %v387 = vpow.pop %v386
    %v388 = vsel %vm381, %v387, 0.0
    %389 = vadd.xlane.f32.xlu0 %v388
    %v390 = vpop.xlane.xlu0 %389
    %v391 = vrcp.pop %v390
    %v392 = vmul.f32 %v387, %v391
    %vm393 = vcmask 31744
    %v395 = vsel %vm393, %v392, 0
    %vm397 = vcmask 1043456
    %v399 = vsel %vm397, %v227, 0
    %401 = vmatprep.subr.mxu0 0.0
    %402 = vmatpush1.msra.mxu0 %v399
    %403 = vmatprep.subr.mxu0 0.0
    %404 = vmatpush1.msra.mxu0 0.0
    %405 = vmatprep.subr.mxu0 0.0
    %406 = vmatpush1.msra.mxu0 0.0
    %407 = vmatprep.subr.mxu0 0.0
    %408 = vmatpush1.msra.mxu0 0.0
    %409 = vmatprep.subr.mxu0 0.0
    %410 = vmatpush1.msra.mxu0 0.0
    %411 = vmatprep.subr.mxu0 0.0
    %412 = vmatpush1.msra.mxu0 0.0
    %413 = vmatprep.subr.mxu0 0.0
    %414 = vmatpush1.msra.mxu0 0.0
    %415 = vmatprep.subr.mxu0 0.0
    %416 = vmatpush1.msra.mxu0 0.0
    %417 = vmatprep.subr.mxu0 0.0
    %418 = vmatpush1.msra.mxu0 0.0
    %419 = vmatprep.subr.mxu0 0.0
    %420 = vmatpush1.msra.mxu0 0.0
    %421 = vmatprep.subr.mxu0 0.0
    %422 = vmatpush1.msra.mxu0 0.0
    %423 = vmatprep.subr.mxu0 0.0
    %424 = vmatpush1.msra.mxu0 0.0
    %425 = vmatprep.subr.mxu0 0.0
    %426 = vmatpush1.msra.mxu0 0.0
    %427 = vmatprep.subr.mxu0 0.0
    %428 = vmatpush1.msra.mxu0 0.0
    %429 = vmatprep.subr.mxu0 0.0
    %430 = vmatpush1.msra.mxu0 0.0
    %431 = vmatprep.subr.mxu0 0.0
    %432 = vmatpush1.msra.mxu0 0.0
    %433 = vmatprep.subr.mxu0 0.0
    %434 = vmatpush1.msra.mxu0 0.0
    %435 = vmatprep.subr.mxu0 0.0
    %436 = vmatpush1.msra.mxu0 0.0
    %437 = vmatprep.subr.mxu0 0.0
    %438 = vmatpush1.msra.mxu0 0.0
    %439 = vmatprep.subr.mxu0 0.0
    %440 = vmatpush1.msra.mxu0 0.0
    %441 = vmatprep.subr.mxu0 0.0
    %442 = vmatpush1.msra.mxu0 0.0
    %443 = vmatprep.subr.mxu0 0.0
    %444 = vmatpush1.msra.mxu0 0.0
    %445 = vmatprep.subr.mxu0 0.0
    %446 = vmatpush1.msra.mxu0 0.0
    %447 = vmatprep.subr.mxu0 0.0
    %448 = vmatpush1.msra.mxu0 0.0
    %449 = vmatprep.subr.mxu0 0.0
    %450 = vmatpush1.msra.mxu0 0.0
    %451 = vmatprep.subr.mxu0 0.0
    %452 = vmatpush1.msra.mxu0 0.0
    %453 = vmatprep.subr.mxu0 0.0
    %454 = vmatpush1.msra.mxu0 0.0
    %455 = vmatprep.subr.mxu0 0.0
    %456 = vmatpush1.msra.mxu0 0.0
    %457 = vmatprep.subr.mxu0 0.0
    %458 = vmatpush1.msra.mxu0 0.0
    %459 = vmatprep.subr.mxu0 0.0
    %460 = vmatpush1.msra.mxu0 0.0
    %461 = vmatprep.subr.mxu0 0.0
    %462 = vmatpush1.msra.mxu0 0.0
    %463 = vmatprep.subr.mxu0 0.0
    %464 = vmatpush1.msra.mxu0 0.0
    %465 = vmatprep.mubr.f32.mxu0 0.0
    %466 = vmatmul.mubr.f32.gmra.mrb[0].mxu0 %v395
    %v467 = vpop.f32.mrb[0].mxu0
    %v468 = vadd.f32 0.0, %v467
    %v469 = vpop.f32.mrb[0].mxu0
    %470 = vdwg.mxu0
    %v471 = vld [vmem:[#allocation4] sm:$0xff]
    %v472 = vld [vmem:[#allocation4 + $0x8] sm:$0xff]
    %v473 = vld [vmem:[#allocation4 + $0x10] sm:$0xff]
    %v474 = vld [vmem:[#allocation4 + $0x18] sm:$0xff]
    %v475 = vld [vmem:[#allocation4 + $0x20] sm:$0xff]
    %v476 = vld [vmem:[#allocation4 + $0x28] sm:$0xff]
    %v477 = vld [vmem:[#allocation4 + $0x30] sm:$0xff]
    %v478 = vld [vmem:[#allocation4 + $0x38] sm:$0xff]
    %v479 = vlaneseq
    %v480 = vshrl.u32 %v479, 7
    %v481 = vsub.s32 0, %v480
    %v482 = vrot.slane %v46, %v481
    %v484 = vsel %vm303, %v468, 0
    %486 = vmatprep.subr.mxu0 0.0
    %487 = vmatpush1.msra.mxu0 %v471
    %488 = vmatprep.subr.mxu0 0.0
    %489 = vmatpush1.msra.mxu0 %v472
    %490 = vmatprep.subr.mxu0 0.0
    %491 = vmatpush1.msra.mxu0 %v473
    %492 = vmatprep.subr.mxu0 0.0
    %493 = vmatpush1.msra.mxu0 %v474
    %494 = vmatprep.subr.mxu0 0.0
    %495 = vmatpush1.msra.mxu0 %v475
    %496 = vmatprep.subr.mxu0 0.0
    %497 = vmatpush1.msra.mxu0 %v476
    %498 = vmatprep.subr.mxu0 0.0
    %499 = vmatpush1.msra.mxu0 %v477
    %500 = vmatprep.subr.mxu0 0.0
    %501 = vmatpush1.msra.mxu0 %v478
    %502 = vmatprep.subr.mxu0 0.0
    %503 = vmatpush1.msra.mxu0 0.0
    %504 = vmatprep.subr.mxu0 0.0
    %505 = vmatpush1.msra.mxu0 0.0
    %506 = vmatprep.subr.mxu0 0.0
    %507 = vmatpush1.msra.mxu0 0.0
    %508 = vmatprep.subr.mxu0 0.0
    %509 = vmatpush1.msra.mxu0 0.0
    %510 = vmatprep.subr.mxu0 0.0
    %511 = vmatpush1.msra.mxu0 0.0
    %512 = vmatprep.subr.mxu0 0.0
    %513 = vmatpush1.msra.mxu0 0.0
    %514 = vmatprep.subr.mxu0 0.0
    %515 = vmatpush1.msra.mxu0 0.0
    %516 = vmatprep.subr.mxu0 0.0
    %517 = vmatpush1.msra.mxu0 0.0
    %518 = vmatprep.subr.mxu0 0.0
    %519 = vmatpush1.msra.mxu0 0.0
    %520 = vmatprep.subr.mxu0 0.0
    %521 = vmatpush1.msra.mxu0 0.0
    %522 = vmatprep.subr.mxu0 0.0
    %523 = vmatpush1.msra.mxu0 0.0
    %524 = vmatprep.subr.mxu0 0.0
    %525 = vmatpush1.msra.mxu0 0.0
    %526 = vmatprep.subr.mxu0 0.0
    %527 = vmatpush1.msra.mxu0 0.0
    %528 = vmatprep.subr.mxu0 0.0
    %529 = vmatpush1.msra.mxu0 0.0
    %530 = vmatprep.subr.mxu0 0.0
    %531 = vmatpush1.msra.mxu0 0.0
    %532 = vmatprep.subr.mxu0 0.0
    %533 = vmatpush1.msra.mxu0 0.0
    %534 = vmatprep.subr.mxu0 0.0
    %535 = vmatpush1.msra.mxu0 0.0
    %536 = vmatprep.subr.mxu0 0.0
    %537 = vmatpush1.msra.mxu0 0.0
    %538 = vmatprep.subr.mxu0 0.0
    %539 = vmatpush1.msra.mxu0 0.0
    %540 = vmatprep.subr.mxu0 0.0
    %541 = vmatpush1.msra.mxu0 0.0
    %542 = vmatprep.subr.mxu0 0.0
    %543 = vmatpush1.msra.mxu0 0.0
    %544 = vmatprep.subr.mxu0 0.0
    %545 = vmatpush1.msra.mxu0 0.0
    %546 = vmatprep.subr.mxu0 0.0
    %547 = vmatpush1.msra.mxu0 0.0
    %548 = vmatprep.subr.mxu0 0.0
    %549 = vmatpush1.msra.mxu0 0.0
    %550 = vmatprep.mubr.f32.mxu0 0.0
    %551 = vmatmul.mubr.f32.gmra.mrb[0].mxu0 %v484
    %v552 = vpop.f32.mrb[0].mxu0
    %v553 = vadd.f32 %v482, %v552
    %v554 = vpop.f32.mrb[0].mxu0
    %555 = vdwg.mxu0
    %v556 = vlaneseq
    %v557 = vshrl.u32 %v556, 7
    %v558 = vsub.s32 3, %v557
    %v559 = vrot.slane %v46, %v558
    %v560 = vmul.f32 %v302, %v559
    %vm561 = vcmask 257024
    %v562 = vsel %vm561, %v560, 0.0
    %563 = vadd.xlane.f32.xlu0 %v562
    %v564 = vpop.xlane.xlu0 %563
    %v565 = vlaneseq
    %v566 = vshrl.u32 %v565, 7
    %v567 = vsub.s32 4, %v566
    %v568 = vrot.slane %v46, %v567
    %v569 = vadd.f32 %v564, %v568
    %v570 = vmul.f32 %v569, 0.5
    %v571 = vtanh.pop %v570
    %v572 = vmul.f32 %v571, 0.5
    %v573 = vadd.f32 %v572, 0.5
    %v574 = vlaneseq
    %v575 = vshrl.u32 %v574, 7
    %v576 = vsub.s32 1, %v575
    %v577 = vrot.slane %v46, %v576
    %v578 = vadd.f32 %v229, %v577
    %v579 = vmul.f32 %v578, 0.5
    %v580 = vtanh.pop %v579
    %v581 = vmul.f32 %v580, 0.5
    %v582 = vadd.f32 %v581, 0.5
    %584 = vrot.lane.b32.xlu0 %v577, 64
    %v585 = vpop.permute.xlu0 %584
    %v587 = vmul.f32 %v582, %v585
    %589 = vrot.lane.b32.xlu0 %v587, 64
    %v590 = vpop.permute.xlu0 %589
    %v592 = vadd.f32 %v229, %v590
    %v593 = vtanh.pop %v592
    %v594 = vsub.f32 1.0, %v582
    %596 = vrot.lane.b32.xlu0 %v593, 96
    %v597 = vpop.permute.xlu0 %596
    %v599 = vmul.f32 %v594, %v597
    %v600 = vlaneseq
    %v601 = vshrl.u32 %v600, 7
    %v602 = vsub.s32 2, %v601
    %v603 = vrot.slane %v46, %v602
    %605 = vrot.lane.b32.xlu0 %v603, 32
    %v606 = vpop.permute.xlu0 %605
    %v608 = vmul.f32 %v582, %v606
    %v609 = vadd.f32 %v599, %v608
    %v610 = vld [vmem:[#allocation4 + $0x40] sm:$0xff]
    %v611 = vld [vmem:[#allocation4 + $0x48] sm:$0xff]
    %v612 = vld [vmem:[#allocation4 + $0x50] sm:$0xff]
    %v613 = vld [vmem:[#allocation4 + $0x58] sm:$0xff]
    %615 = vset.pattern.permute.xlu0 0
    %616 = vperm.xlu0 %615, %v573
    %v617 = vpop.permute.xlu0 %616
    %v619 = vlaneseq
    %v620 = vshrl.u32 %v619, 7
    %v621 = vsub.s32 6, %v620
    %v622 = vrot.slane %v46, %v621
    %v623 = vmul.f32 %v617, %v622
    %625 = vrot.lane.b32.xlu0 %v609, 96
    %v626 = vpop.permute.xlu0 %625
    %vm627 = vcmask 261120
    %v628 = vsel %vm627, %v626, 0
    %630 = vmatprep.subr.mxu0 0.0
    %631 = vmatpush1.msra.mxu0 %v610
    %632 = vmatprep.subr.mxu0 0.0
    %633 = vmatpush1.msra.mxu0 %v611
    %634 = vmatprep.subr.mxu0 0.0
    %635 = vmatpush1.msra.mxu0 %v612
    %636 = vmatprep.subr.mxu0 0.0
    %637 = vmatpush1.msra.mxu0 %v613
    %638 = vmatprep.subr.mxu0 0.0
    %639 = vmatpush1.msra.mxu0 0.0
    %640 = vmatprep.subr.mxu0 0.0
    %641 = vmatpush1.msra.mxu0 0.0
    %642 = vmatprep.subr.mxu0 0.0
    %643 = vmatpush1.msra.mxu0 0.0
    %644 = vmatprep.subr.mxu0 0.0
    %645 = vmatpush1.msra.mxu0 0.0
    %646 = vmatprep.subr.mxu0 0.0
    %647 = vmatpush1.msra.mxu0 0.0
    %648 = vmatprep.subr.mxu0 0.0
    %649 = vmatpush1.msra.mxu0 0.0
    %650 = vmatprep.subr.mxu0 0.0
    %651 = vmatpush1.msra.mxu0 0.0
    %652 = vmatprep.subr.mxu0 0.0
    %653 = vmatpush1.msra.mxu0 0.0
    %654 = vmatprep.subr.mxu0 0.0
    %655 = vmatpush1.msra.mxu0 0.0
    %656 = vmatprep.subr.mxu0 0.0
    %657 = vmatpush1.msra.mxu0 0.0
    %658 = vmatprep.subr.mxu0 0.0
    %659 = vmatpush1.msra.mxu0 0.0
    %660 = vmatprep.subr.mxu0 0.0
    %661 = vmatpush1.msra.mxu0 0.0
    %662 = vmatprep.subr.mxu0 0.0
    %663 = vmatpush1.msra.mxu0 0.0
    %664 = vmatprep.subr.mxu0 0.0
    %665 = vmatpush1.msra.mxu0 0.0
    %666 = vmatprep.subr.mxu0 0.0
    %667 = vmatpush1.msra.mxu0 0.0
    %668 = vmatprep.subr.mxu0 0.0
    %669 = vmatpush1.msra.mxu0 0.0
    %670 = vmatprep.subr.mxu0 0.0
    %671 = vmatpush1.msra.mxu0 0.0
    %672 = vmatprep.subr.mxu0 0.0
    %673 = vmatpush1.msra.mxu0 0.0
    %674 = vmatprep.subr.mxu0 0.0
    %675 = vmatpush1.msra.mxu0 0.0
    %676 = vmatprep.subr.mxu0 0.0
    %677 = vmatpush1.msra.mxu0 0.0
    %678 = vmatprep.subr.mxu0 0.0
    %679 = vmatpush1.msra.mxu0 0.0
    %680 = vmatprep.subr.mxu0 0.0
    %681 = vmatpush1.msra.mxu0 0.0
    %682 = vmatprep.subr.mxu0 0.0
    %683 = vmatpush1.msra.mxu0 0.0
    %684 = vmatprep.subr.mxu0 0.0
    %685 = vmatpush1.msra.mxu0 0.0
    %686 = vmatprep.subr.mxu0 0.0
    %687 = vmatpush1.msra.mxu0 0.0
    %688 = vmatprep.subr.mxu0 0.0
    %689 = vmatpush1.msra.mxu0 0.0
    %690 = vmatprep.subr.mxu0 0.0
    %691 = vmatpush1.msra.mxu0 0.0
    %692 = vmatprep.subr.mxu0 0.0
    %693 = vmatpush1.msra.mxu0 0.0
    %694 = vmatprep.mubr.f32.mxu0 0.0
    %695 = vmatmul.mubr.f32.gmra.mrb[0].mxu0 %v628
    %v696 = vpop.f32.mrb[0].mxu0
    %v697 = vadd.f32 %v623, %v696
    %v698 = vpop.f32.mrb[0].mxu0
    %699 = vdwg.mxu0
    %v700 = vlaneseq
    %v701 = vshrl.u32 %v700, 7
    %v702 = vsub.s32 5, %v701
    %v703 = vrot.slane %v46, %v702
    %v704 = vadd.f32 %v697, %v703
    %v705 = vmax.f32 %v704, 0.0
    %v706 = vld [vmem:[#allocation4 + $0x60] sm:$0xff]
    %v707 = vld [vmem:[#allocation4 + $0x68] sm:$0xff]
    %v708 = vld [vmem:[#allocation4 + $0x70] sm:$0xff]
    %v709 = vld [vmem:[#allocation4 + $0x78] sm:$0xff]
    %v710 = vld [vmem:[#allocation4 + $0x80] sm:$0xff]
    %v711 = vld [vmem:[#allocation4 + $0x88] sm:$0xff]
    %v712 = vld [vmem:[#allocation4 + $0x90] sm:$0xff]
    %v713 = vld [vmem:[#allocation4 + $0x98] sm:$0xff]
    %v714 = vlaneseq
    %v715 = vshrl.u32 %v714, 7
    %v716 = vsub.s32 7, %v715
    %v717 = vrot.slane %v46, %v716
    %v719 = vsel %vm303, %v705, 0
    %721 = vmatprep.subr.mxu0 0.0
    %722 = vmatpush1.msra.mxu0 %v706
    %723 = vmatprep.subr.mxu0 0.0
    %724 = vmatpush1.msra.mxu0 %v707
    %725 = vmatprep.subr.mxu0 0.0
    %726 = vmatpush1.msra.mxu0 %v708
    %727 = vmatprep.subr.mxu0 0.0
    %728 = vmatpush1.msra.mxu0 %v709
    %729 = vmatprep.subr.mxu0 0.0
    %730 = vmatpush1.msra.mxu0 %v710
    %731 = vmatprep.subr.mxu0 0.0
    %732 = vmatpush1.msra.mxu0 %v711
    %733 = vmatprep.subr.mxu0 0.0
    %734 = vmatpush1.msra.mxu0 %v712
    %735 = vmatprep.subr.mxu0 0.0
    %736 = vmatpush1.msra.mxu0 %v713
    %737 = vmatprep.subr.mxu0 0.0
    %738 = vmatpush1.msra.mxu0 0.0
    %739 = vmatprep.subr.mxu0 0.0
    %740 = vmatpush1.msra.mxu0 0.0
    %741 = vmatprep.subr.mxu0 0.0
    %742 = vmatpush1.msra.mxu0 0.0
    %743 = vmatprep.subr.mxu0 0.0
    %744 = vmatpush1.msra.mxu0 0.0
    %745 = vmatprep.subr.mxu0 0.0
    %746 = vmatpush1.msra.mxu0 0.0
    %747 = vmatprep.subr.mxu0 0.0
    %748 = vmatpush1.msra.mxu0 0.0
    %749 = vmatprep.subr.mxu0 0.0
    %750 = vmatpush1.msra.mxu0 0.0
    %751 = vmatprep.subr.mxu0 0.0
    %752 = vmatpush1.msra.mxu0 0.0
    %753 = vmatprep.subr.mxu0 0.0
    %754 = vmatpush1.msra.mxu0 0.0
    %755 = vmatprep.subr.mxu0 0.0
    %756 = vmatpush1.msra.mxu0 0.0
    %757 = vmatprep.subr.mxu0 0.0
    %758 = vmatpush1.msra.mxu0 0.0
    %759 = vmatprep.subr.mxu0 0.0
    %760 = vmatpush1.msra.mxu0 0.0
    %761 = vmatprep.subr.mxu0 0.0
    %762 = vmatpush1.msra.mxu0 0.0
    %763 = vmatprep.subr.mxu0 0.0
    %764 = vmatpush1.msra.mxu0 0.0
    %765 = vmatprep.subr.mxu0 0.0
    %766 = vmatpush1.msra.mxu0 0.0
    %767 = vmatprep.subr.mxu0 0.0
    %768 = vmatpush1.msra.mxu0 0.0
    %769 = vmatprep.subr.mxu0 0.0
    %770 = vmatpush1.msra.mxu0 0.0
    %771 = vmatprep.subr.mxu0 0.0
    %772 = vmatpush1.msra.mxu0 0.0
    %773 = vmatprep.subr.mxu0 0.0
    %774 = vmatpush1.msra.mxu0 0.0
    %775 = vmatprep.subr.mxu0 0.0
    %776 = vmatpush1.msra.mxu0 0.0
    %777 = vmatprep.subr.mxu0 0.0
    %778 = vmatpush1.msra.mxu0 0.0
    %779 = vmatprep.subr.mxu0 0.0
    %780 = vmatpush1.msra.mxu0 0.0
    %781 = vmatprep.subr.mxu0 0.0
    %782 = vmatpush1.msra.mxu0 0.0
    %783 = vmatprep.subr.mxu0 0.0
    %784 = vmatpush1.msra.mxu0 0.0
    %785 = vmatprep.mubr.f32.mxu0 0.0
    %786 = vmatmul.mubr.f32.gmra.mrb[0].mxu0 %v719
    %v787 = vpop.f32.mrb[0].mxu0
    %v788 = vadd.f32 %v717, %v787
    %v789 = vpop.f32.mrb[0].mxu0
    %790 = vdwg.mxu0
    %v791 = vtanh.pop %v788
    %793 = vrot.lane.b32.xlu0 %v791, 32
    %v794 = vpop.permute.xlu0 %793
    %v796 = vadd.f32 %v609, %v794
    %798 = vrot.lane.b32.xlu0 %v796, 96
    %v799 = vpop.permute.xlu0 %798
    %v801 = vsel %vm561, %v799, 0.0
    %802 = vadd.xlane.f32.xlu0 %v801
    %v803 = vpop.xlane.xlu0 %802
    %v804 = vrcp.pop 32.0
    %v805 = vmul.f32 %v803, %v804
    %v806 = vsub.f32 %v796, %v805
    %v807 = vmul.f32 %v806, %v806
    %809 = vrot.lane.b32.xlu0 %v807, 96
    %v810 = vpop.permute.xlu0 %809
    %v812 = vsel %vm561, %v810, 0.0
    %813 = vadd.xlane.f32.xlu0 %v812
    %v814 = vpop.xlane.xlu0 %813
    %v815 = vmul.f32 %v814, %v804
    %v816 = vadd.f32 %v815, 1e-05
    %v817 = vrsqrt.pop %v816
    %v818 = vmul.f32 %v806, %v817
    %v819 = vlaneseq
    %v820 = vshrl.u32 %v819, 7
    %v821 = vsub.s32 0, %v820
    %v822 = vrot.slane %v47, %v821
    %824 = vrot.lane.b32.xlu0 %v822, 32
    %v825 = vpop.permute.xlu0 %824
    %v827 = vmul.f32 %v818, %v825
    %v828 = vlaneseq
    %v829 = vshrl.u32 %v828, 7
    %v830 = vsub.s32 1, %v829
    %v831 = vrot.slane %v47, %v830
    %833 = vrot.lane.b32.xlu0 %v831, 32
    %v834 = vpop.permute.xlu0 %833
    %v836 = vadd.f32 %v827, %v834
    %v837 = vld [vmem:[#allocation4 + $0xa0] sm:$0xff]
    %v838 = vld [vmem:[#allocation4 + $0xa8] sm:$0xff]
    %v839 = vld [vmem:[#allocation4 + $0xb0] sm:$0xff]
    %v840 = vld [vmem:[#allocation4 + $0xb8] sm:$0xff]
    %842 = vrot.lane.b32.xlu0 %v836, 96
    %v843 = vpop.permute.xlu0 %842
    %v844 = vsel %vm627, %v843, 0
    %846 = vmatprep.subr.mxu0 0.0
    %847 = vmatpush1.msra.mxu0 %v837
    %848 = vmatprep.subr.mxu0 0.0
    %849 = vmatpush1.msra.mxu0 %v838
    %850 = vmatprep.subr.mxu0 0.0
    %851 = vmatpush1.msra.mxu0 %v839
    %852 = vmatprep.subr.mxu0 0.0
    %853 = vmatpush1.msra.mxu0 %v840
    %854 = vmatprep.subr.mxu0 0.0
    %855 = vmatpush1.msra.mxu0 0.0
    %856 = vmatprep.subr.mxu0 0.0
    %857 = vmatpush1.msra.mxu0 0.0
    %858 = vmatprep.subr.mxu0 0.0
    %859 = vmatpush1.msra.mxu0 0.0
    %860 = vmatprep.subr.mxu0 0.0
    %861 = vmatpush1.msra.mxu0 0.0
    %862 = vmatprep.subr.mxu0 0.0
    %863 = vmatpush1.msra.mxu0 0.0
    %864 = vmatprep.subr.mxu0 0.0
    %865 = vmatpush1.msra.mxu0 0.0
    %866 = vmatprep.subr.mxu0 0.0
    %867 = vmatpush1.msra.mxu0 0.0
    %868 = vmatprep.subr.mxu0 0.0
    %869 = vmatpush1.msra.mxu0 0.0
    %870 = vmatprep.subr.mxu0 0.0
    %871 = vmatpush1.msra.mxu0 0.0
    %872 = vmatprep.subr.mxu0 0.0
    %873 = vmatpush1.msra.mxu0 0.0
    %874 = vmatprep.subr.mxu0 0.0
    %875 = vmatpush1.msra.mxu0 0.0
    %876 = vmatprep.subr.mxu0 0.0
    %877 = vmatpush1.msra.mxu0 0.0
    %878 = vmatprep.subr.mxu0 0.0
    %879 = vmatpush1.msra.mxu0 0.0
    %880 = vmatprep.subr.mxu0 0.0
    %881 = vmatpush1.msra.mxu0 0.0
    %882 = vmatprep.subr.mxu0 0.0
    %883 = vmatpush1.msra.mxu0 0.0
    %884 = vmatprep.subr.mxu0 0.0
    %885 = vmatpush1.msra.mxu0 0.0
    %886 = vmatprep.subr.mxu0 0.0
    %887 = vmatpush1.msra.mxu0 0.0
    %888 = vmatprep.subr.mxu0 0.0
    %889 = vmatpush1.msra.mxu0 0.0
    %890 = vmatprep.subr.mxu0 0.0
    %891 = vmatpush1.msra.mxu0 0.0
    %892 = vmatprep.subr.mxu0 0.0
    %893 = vmatpush1.msra.mxu0 0.0
    %894 = vmatprep.subr.mxu0 0.0
    %895 = vmatpush1.msra.mxu0 0.0
    %896 = vmatprep.subr.mxu0 0.0
    %897 = vmatpush1.msra.mxu0 0.0
    %898 = vmatprep.subr.mxu0 0.0
    %899 = vmatpush1.msra.mxu0 0.0
    %900 = vmatprep.subr.mxu0 0.0
    %901 = vmatpush1.msra.mxu0 0.0
    %902 = vmatprep.subr.mxu0 0.0
    %903 = vmatpush1.msra.mxu0 0.0
    %904 = vmatprep.subr.mxu0 0.0
    %905 = vmatpush1.msra.mxu0 0.0
    %906 = vmatprep.subr.mxu0 0.0
    %907 = vmatpush1.msra.mxu0 0.0
    %908 = vmatprep.subr.mxu0 0.0
    %909 = vmatpush1.msra.mxu0 0.0
    %910 = vmatprep.mubr.f32.mxu0 0.0
    %911 = vmatmul.mubr.f32.gmra.mrb[0].mxu0 %v844
    %v912 = vpop.f32.mrb[0].mxu0
    %v913 = vadd.f32 %v300, %v912
    %v914 = vpop.f32.mrb[0].mxu0
    %915 = vdwg.mxu0
    %v916 = vlaneseq
    %v917 = vshrl.u32 %v916, 7
    %v918 = vsub.s32 2, %v917
    %v919 = vrot.slane %v47, %v918
    %v920 = vadd.f32 %v913, %v919
    %v921 = vmax.f32 %v920, 0.0
    %v922 = vld [vmem:[#allocation4 + $0xc0] sm:$0xff]
    %v923 = vld [vmem:[#allocation4 + $0xc8] sm:$0xff]
    %v924 = vld [vmem:[#allocation4 + $0xd0] sm:$0xff]
    %v925 = vld [vmem:[#allocation4 + $0xd8] sm:$0xff]
    %v926 = vld [vmem:[#allocation4 + $0xe0] sm:$0xff]
    %v927 = vld [vmem:[#allocation4 + $0xe8] sm:$0xff]
    %v928 = vld [vmem:[#allocation4 + $0xf0] sm:$0xff]
    %v929 = vld [vmem:[#allocation4 + $0xf8] sm:$0xff]
    %v930 = vlaneseq
    %v931 = vshrl.u32 %v930, 7
    %v932 = vsub.s32 3, %v931
    %v933 = vrot.slane %v47, %v932
    %v935 = vsel %vm303, %v921, 0
    %937 = vmatprep.subr.mxu0 0.0
    %938 = vmatpush1.msra.mxu0 %v922
    %939 = vmatprep.subr.mxu0 0.0
    %940 = vmatpush1.msra.mxu0 %v923
    %941 = vmatprep.subr.mxu0 0.0
    %942 = vmatpush1.msra.mxu0 %v924
    %943 = vmatprep.subr.mxu0 0.0
    %944 = vmatpush1.msra.mxu0 %v925
    %945 = vmatprep.subr.mxu0 0.0
    %946 = vmatpush1.msra.mxu0 %v926
    %947 = vmatprep.subr.mxu0 0.0
    %948 = vmatpush1.msra.mxu0 %v927
    %949 = vmatprep.subr.mxu0 0.0
    %950 = vmatpush1.msra.mxu0 %v928
    %951 = vmatprep.subr.mxu0 0.0
    %952 = vmatpush1.msra.mxu0 %v929
    %953 = vmatprep.subr.mxu0 0.0
    %954 = vmatpush1.msra.mxu0 0.0
    %955 = vmatprep.subr.mxu0 0.0
    %956 = vmatpush1.msra.mxu0 0.0
    %957 = vmatprep.subr.mxu0 0.0
    %958 = vmatpush1.msra.mxu0 0.0
    %959 = vmatprep.subr.mxu0 0.0
    %960 = vmatpush1.msra.mxu0 0.0
    %961 = vmatprep.subr.mxu0 0.0
    %962 = vmatpush1.msra.mxu0 0.0
    %963 = vmatprep.subr.mxu0 0.0
    %964 = vmatpush1.msra.mxu0 0.0
    %965 = vmatprep.subr.mxu0 0.0
    %966 = vmatpush1.msra.mxu0 0.0
    %967 = vmatprep.subr.mxu0 0.0
    %968 = vmatpush1.msra.mxu0 0.0
    %969 = vmatprep.subr.mxu0 0.0
    %970 = vmatpush1.msra.mxu0 0.0
    %971 = vmatprep.subr.mxu0 0.0
    %972 = vmatpush1.msra.mxu0 0.0
    %973 = vmatprep.subr.mxu0 0.0
    %974 = vmatpush1.msra.mxu0 0.0
    %975 = vmatprep.subr.mxu0 0.0
    %976 = vmatpush1.msra.mxu0 0.0
    %977 = vmatprep.subr.mxu0 0.0
    %978 = vmatpush1.msra.mxu0 0.0
    %979 = vmatprep.subr.mxu0 0.0
    %980 = vmatpush1.msra.mxu0 0.0
    %981 = vmatprep.subr.mxu0 0.0
    %982 = vmatpush1.msra.mxu0 0.0
    %983 = vmatprep.subr.mxu0 0.0
    %984 = vmatpush1.msra.mxu0 0.0
    %985 = vmatprep.subr.mxu0 0.0
    %986 = vmatpush1.msra.mxu0 0.0
    %987 = vmatprep.subr.mxu0 0.0
    %988 = vmatpush1.msra.mxu0 0.0
    %989 = vmatprep.subr.mxu0 0.0
    %990 = vmatpush1.msra.mxu0 0.0
    %991 = vmatprep.subr.mxu0 0.0
    %992 = vmatpush1.msra.mxu0 0.0
    %993 = vmatprep.subr.mxu0 0.0
    %994 = vmatpush1.msra.mxu0 0.0
    %995 = vmatprep.subr.mxu0 0.0
    %996 = vmatpush1.msra.mxu0 0.0
    %997 = vmatprep.subr.mxu0 0.0
    %998 = vmatpush1.msra.mxu0 0.0
    %999 = vmatprep.subr.mxu0 0.0
    %1000 = vmatpush1.msra.mxu0 0.0
    %1001 = vmatprep.mubr.f32.mxu0 0.0
    %1002 = vmatmul.mubr.f32.gmra.mrb[0].mxu0 %v935
    %v1003 = vpop.f32.mrb[0].mxu0
    %v1004 = vadd.f32 %v933, %v1003
    %v1005 = vpop.f32.mrb[0].mxu0
    %1006 = vdwg.mxu0
    %v1007 = vmax.f32 %v1004, 0.0
    %v1008 = vld [vmem:[#allocation4 + $0x100] sm:$0xff]
    %v1009 = vld [vmem:[#allocation4 + $0x108] sm:$0xff]
    %v1010 = vld [vmem:[#allocation4 + $0x110] sm:$0xff]
    %v1011 = vld [vmem:[#allocation4 + $0x118] sm:$0xff]
    %v1012 = vlaneseq
    %v1013 = vshrl.u32 %v1012, 7
    %v1014 = vsub.s32 4, %v1013
    %v1015 = vrot.slane %v47, %v1014
    %v1017 = vsel %vm627, %v1007, 0
    %1019 = vmatprep.subr.mxu0 0.0
    %1020 = vmatpush1.msra.mxu0 %v1008
    %1021 = vmatprep.subr.mxu0 0.0
    %1022 = vmatpush1.msra.mxu0 %v1009
    %1023 = vmatprep.subr.mxu0 0.0
    %1024 = vmatpush1.msra.mxu0 %v1010
    %1025 = vmatprep.subr.mxu0 0.0
    %1026 = vmatpush1.msra.mxu0 %v1011
    %1027 = vmatprep.subr.mxu0 0.0
    %1028 = vmatpush1.msra.mxu0 0.0
    %1029 = vmatprep.subr.mxu0 0.0
    %1030 = vmatpush1.msra.mxu0 0.0
    %1031 = vmatprep.subr.mxu0 0.0
    %1032 = vmatpush1.msra.mxu0 0.0
    %1033 = vmatprep.subr.mxu0 0.0
    %1034 = vmatpush1.msra.mxu0 0.0
    %1035 = vmatprep.subr.mxu0 0.0
    %1036 = vmatpush1.msra.mxu0 0.0
    %1037 = vmatprep.subr.mxu0 0.0
    %1038 = vmatpush1.msra.mxu0 0.0
    %1039 = vmatprep.subr.mxu0 0.0
    %1040 = vmatpush1.msra.mxu0 0.0
    %1041 = vmatprep.subr.mxu0 0.0
    %1042 = vmatpush1.msra.mxu0 0.0
    %1043 = vmatprep.subr.mxu0 0.0
    %1044 = vmatpush1.msra.mxu0 0.0
    %1045 = vmatprep.subr.mxu0 0.0
    %1046 = vmatpush1.msra.mxu0 0.0
    %1047 = vmatprep.subr.mxu0 0.0
    %1048 = vmatpush1.msra.mxu0 0.0
    %1049 = vmatprep.subr.mxu0 0.0
    %1050 = vmatpush1.msra.mxu0 0.0
    %1051 = vmatprep.subr.mxu0 0.0
    %1052 = vmatpush1.msra.mxu0 0.0
    %1053 = vmatprep.subr.mxu0 0.0
    %1054 = vmatpush1.msra.mxu0 0.0
    %1055 = vmatprep.subr.mxu0 0.0
    %1056 = vmatpush1.msra.mxu0 0.0
    %1057 = vmatprep.subr.mxu0 0.0
    %1058 = vmatpush1.msra.mxu0 0.0
    %1059 = vmatprep.subr.mxu0 0.0
    %1060 = vmatpush1.msra.mxu0 0.0
    %1061 = vmatprep.subr.mxu0 0.0
    %1062 = vmatpush1.msra.mxu0 0.0
    %1063 = vmatprep.subr.mxu0 0.0
    %1064 = vmatpush1.msra.mxu0 0.0
    %1065 = vmatprep.subr.mxu0 0.0
    %1066 = vmatpush1.msra.mxu0 0.0
    %1067 = vmatprep.subr.mxu0 0.0
    %1068 = vmatpush1.msra.mxu0 0.0
    %1069 = vmatprep.subr.mxu0 0.0
    %1070 = vmatpush1.msra.mxu0 0.0
    %1071 = vmatprep.subr.mxu0 0.0
    %1072 = vmatpush1.msra.mxu0 0.0
    %1073 = vmatprep.subr.mxu0 0.0
    %1074 = vmatpush1.msra.mxu0 0.0
    %1075 = vmatprep.subr.mxu0 0.0
    %1076 = vmatpush1.msra.mxu0 0.0
    %1077 = vmatprep.subr.mxu0 0.0
    %1078 = vmatpush1.msra.mxu0 0.0
    %1079 = vmatprep.subr.mxu0 0.0
    %1080 = vmatpush1.msra.mxu0 0.0
    %1081 = vmatprep.subr.mxu0 0.0
    %1082 = vmatpush1.msra.mxu0 0.0
    %1083 = vmatprep.mubr.f32.mxu0 0.0
    %1084 = vmatmul.mubr.f32.gmra.mrb[0].mxu0 %v1017
    %v1085 = vpop.f32.mrb[0].mxu0
    %v1086 = vadd.f32 %v1015, %v1085
    %v1087 = vpop.f32.mrb[0].mxu0
    %1088 = vdwg.mxu0
    %v1089 = vsel %vm381, %v1086, -inf
    %1090 = vmax.xlane.f32.xlu0 %v1089
    %v1091 = vpop.xlane.xlu0 %1090
    %v1092 = vsub.f32 %v1086, %v1091
    %v1093 = vmul.f32 %v1092, 1.442695
    %v1094 = vpow.pop %v1093
    %v1095 = vsel %vm381, %v1094, 0.0
    %1096 = vadd.xlane.f32.xlu0 %v1095
    %v1097 = vpop.xlane.xlu0 %1096
    %v1098 = vrcp.pop %v1097
    %v1099 = vmul.f32 %v1094, %v1098
    %v1100 = vlaneseq
    %v1101 = vshrl.u32 %v1100, 7
    %v1102 = vsub.s32 5, %v1101
    %v1103 = vrot.slane %v47, %v1102
    %v1104 = vmul.f32 %v1099, %v1103
    %v1105 = vsel %vm381, %v1104, 0.0
    %1106 = vadd.xlane.f32.xlu0 %v1105
    %v1107 = vpop.xlane.xlu0 %1106
    %v1109 = vadd.f32 %v553, %v843
    %1110 = vst.msk [vmem:[%s4] sm:$0xf] %vm561, %v1109
    %1111 = vst.msk [vmem:[%s4 + $0x4] sm:$0xf] %vm381, %v392
    %1112 = vst.msk [vmem:[%s4 + $0x8] sm:$0xf] %vm381, %v1099
    %vm1113 = vcmask 3072
    %1114 = vst.msk [vmem:[%s4 + $0xc] sm:$0xf] %vm1113, %v573
    %1115 = vst.msk [vmem:[%s4 + $0x10] sm:$0xf] %vm1113, %v1107
    // Predicated region
    $region26: #{mindfulness_forward.1} parent=1 // pred_check
      _
    $region27: #{mindfulness_forward.1} parent=1 // pred_check_branch
      %1117 = sbr.rel (0) target = $region29
    $region28: #{mindfulness_forward.1} parent=1 // pred_region
      _
    $region29: #{mindfulness_forward.1} parent=1 // pred_fallthru
      _
    // Predicated region
    $region30: #{mindfulness_forward.1} parent=1 // pred_check
      _
    $region31: #{mindfulness_forward.1} parent=1 // pred_check_branch
      %1119 = sbr.rel (0) target = $region33
    $region32: #{mindfulness_forward.1} parent=1 // pred_region
      _
    $region33: #{mindfulness_forward.1} parent=1 // pred_fallthru
      _
    %1120 = vsyncpa [#allocation3], 1
    %1121 = vsyncpa [#allocation5], 1

</llo_original>
